<compile_context>
chip_gen: v7x
topology: tpu7x:2x2x1
jax: 0.10.0
libtpu: 0.0.40
codegen_flags: <defaults>
</compile_context>

<pallas_src>
import functools

import numpy as np
import jax
import jax.numpy as jnp
from jax.experimental import pallas as pl
from jax.experimental.pallas import tpu as pltpu


# ----------------------------- helpers ------------------------------------

def _hardswish(x):
    # matches torch.nn.Hardswish: x * relu6(x + 3) / 6
    return x * jnp.clip(x + 3.0, 0.0, 6.0) * (1.0 / 6.0)


def _fold_bn(conv_bias, gamma, beta, mean, var, eps=1e-5):
    """Fold conv bias + BatchNorm (eval mode) into per-channel scale/bias."""
    s = gamma / jnp.sqrt(var + eps)
    b = beta + s * (conv_bias - mean)
    return s.astype(jnp.float32), b.astype(jnp.float32)


def _dw_masks(H, W):
    """(9, H*W) {0,1} validity masks for the 3x3 depthwise taps (pad=1)."""
    ys, xs = np.divmod(np.arange(H * W), W)
    m = np.zeros((9, H * W), np.float32)
    for ky in range(3):
        for kx in range(3):
            yy = ys + ky - 1
            xx = xs + kx - 1
            m[ky * 3 + kx] = ((yy >= 0) & (yy < H) & (xx >= 0) & (xx < W)).astype(np.float32)
    return m


# ----------------------------- fused Pallas kernel --------------------------

def _inverted_residual_kernel(x_ref, mask_ref, w1_ref, b1_ref, wdw_ref,
                              bdw_ref, w2_ref, b2_ref, o_ref, g_ref, *,
                              W, apply_res):
    """Grid = (batch, expanded-channel band).

    Per step: 1x1 expand (one 32-channel band) + BN + hardswish, 3x3 depthwise
    via lane rolls + edge masks, stage the band into g_ref (bf16 VMEM).
    On the last band of each image: 1x1 project + BN (+ residual) and store.
    """
    HW = x_ref.shape[-1]
    CB = w1_ref.shape[0]
    cb = pl.program_id(1)
    last = pl.num_programs(1) - 1

    x = x_ref[0]                                     # (Cin, HW), lane-dense

    # ---- 1x1 expand (this band) + folded BN bias + hardswish ----
    h = jnp.dot(w1_ref[...], x.astype(jnp.bfloat16),
                preferred_element_type=jnp.float32)  # (CB, HW) f32
    h = _hardswish(h + b1_ref[...])

    # ---- 3x3 depthwise via XLU lane rolls + edge masks (no padded scratch) --
    acc = jnp.zeros_like(h)
    for ky in range(3):
        for kx in range(3):
            t = 3 * ky + kx
            s = (ky - 1) * W + (kx - 1)              # flat spatial offset
            if s == 0:
                v = h
            else:
                v = pltpu.roll(h, (-s) % HW, 1)      # v[p] = h[p + s]
                v = v * mask_ref[t:t + 1, :]         # zero invalid (wrapped) taps
            acc = acc + v * wdw_ref[:, t:t + 1]
    g = _hardswish(acc + bdw_ref[...])               # (CB, HW) f32

    # ---- stage band into the persistent bf16 activation buffer ----
    off = pl.multiple_of(cb * CB, CB)
    g_ref[pl.ds(off, CB), :] = g.astype(jnp.bfloat16)

    # ---- last band: 1x1 project + folded BN bias (+ residual), store ----
    @pl.when(cb == last)
    def _finish():
        y = jnp.dot(w2_ref[...], g_ref[...],
                    preferred_element_type=jnp.float32) + b2_ref[...]
        if apply_res:
            y = y + x.astype(jnp.float32)
        o_ref[0] = y.astype(o_ref.dtype)             # lane-dense (Cout, HW) store


def inverted_residual_forward(x_nchw, params, *, use_res_connect=True):
    """Fused InvertedResidual forward. x: (bs, Cin, H, W) NCHW -> NCHW out."""
    bs, Cin, H, W = x_nchw.shape
    HW = H * W
    w1, b1 = params['w1'], params['b1']      # (Cexp, Cin) bf16, (Cexp, 1) f32
    wdw, bdw = params['wdw'], params['bdw']  # (Cexp, 9) f32,   (Cexp, 1) f32
    w2, b2 = params['w2'], params['b2']      # (Cout, Cexp) bf16, (Cout, 1) f32
    Cexp = w1.shape[0]
    Cout = w2.shape[0]
    # NOTE: stride==1 is the only implemented path (see TODO above), so the
    # PyTorch gate `use_res_connect and in_planes == out_planes and stride == 1`
    # reduces to the check below.
    apply_res = bool(use_res_connect and Cin == Cout)

    CB = 32
    if Cexp % CB != 0:
        CB = Cexp
    n_cb = Cexp // CB

    x = x_nchw.reshape(bs, Cin, HW)                  # free reshape (no transpose)
    masks = jnp.asarray(_dw_masks(H, W))             # (9, HW) f32, resident

    elem = jnp.dtype(x_nchw.dtype).itemsize
    flops = 2 * bs * HW * Cexp * (Cin + Cout) + 2 * 9 * bs * HW * Cexp
    bytes_accessed = int(bs * Cin * HW * elem + bs * Cout * HW * elem
                         + w1.size * 2 + w2.size * 2 + wdw.size * 4
                         + (2 * Cexp + Cout) * 4 + masks.size * 4)

    out = pl.pallas_call(
        functools.partial(_inverted_residual_kernel, W=W, apply_res=apply_res),
        out_shape=jax.ShapeDtypeStruct((bs, Cout, HW), x_nchw.dtype),
        grid_spec=pltpu.PrefetchScalarGridSpec(
            num_scalar_prefetch=0,
            grid=(bs, n_cb),
            in_specs=[
                pl.BlockSpec((1, Cin, HW), lambda n, c: (n, 0, 0)),   # x (resident per image)
                pl.BlockSpec((9, HW), lambda n, c: (0, 0)),           # depthwise edge masks
                pl.BlockSpec((CB, Cin), lambda n, c: (c, 0)),         # expand weights band
                pl.BlockSpec((CB, 1), lambda n, c: (c, 0)),           # expand BN bias band
                pl.BlockSpec((CB, 9), lambda n, c: (c, 0)),           # depthwise weights band
                pl.BlockSpec((CB, 1), lambda n, c: (c, 0)),           # depthwise BN bias band
                pl.BlockSpec((Cout, Cexp), lambda n, c: (0, 0)),      # project weights (full)
                pl.BlockSpec((Cout, 1), lambda n, c: (0, 0)),         # project BN bias
            ],
            out_specs=pl.BlockSpec((1, Cout, HW), lambda n, c: (n, 0, 0)),
            scratch_shapes=[pltpu.VMEM((Cexp, HW), jnp.bfloat16)],    # staged expanded act.
        ),
        compiler_params=pltpu.CompilerParams(
            dimension_semantics=("parallel", "arbitrary")),
        cost_estimate=pl.CostEstimate(flops=flops, transcendentals=0,
                                      bytes_accessed=bytes_accessed),
    )(x, masks, w1, b1, wdw, bdw, w2, b2)

    return out.reshape(bs, Cout, H, W)               # free reshape back to NCHW


# ----------------------------- parameter setup ------------------------------

def init_params(key, in_planes, out_planes, expand_ratio):
    """Synthetic InvertedResidual parameters with BN scale pre-folded into W."""
    Cexp = in_planes * expand_ratio
    keys = iter(jax.random.split(key, 32))

    def nrm(shape, scale=0.1):
        return scale * jax.random.normal(next(keys), shape, jnp.float32)

    def bn(c):
        gamma = 1.0 + nrm((c,))
        beta = nrm((c,))
        mean = nrm((c,))
        var = 1.0 + 0.1 * jax.random.uniform(next(keys), (c,), jnp.float32)
        return gamma, beta, mean, var

    # expand 1x1: torch weight (Cexp, Cin, 1, 1) -> (Cexp, Cin)
    w1_t = nrm((Cexp, in_planes))
    s1, b1 = _fold_bn(nrm((Cexp,)), *bn(Cexp))
    w1 = (w1_t * s1[:, None]).astype(jnp.bfloat16)

    # depthwise 3x3: torch weight (Cexp, 1, 3, 3) -> (Cexp, 9)
    wdw_t = nrm((Cexp, 3, 3))
    sdw, bdw = _fold_bn(nrm((Cexp,)), *bn(Cexp))
    wdw = (wdw_t.reshape(Cexp, 9) * sdw[:, None]).astype(jnp.float32)

    # project 1x1: torch weight (Cout, Cexp, 1, 1) -> (Cout, Cexp)
    w2_t = nrm((out_planes, Cexp))
    s2, b2 = _fold_bn(nrm((out_planes,)), *bn(out_planes))
    w2 = (w2_t * s2[:, None]).astype(jnp.bfloat16)

    return dict(w1=w1, b1=b1.reshape(Cexp, 1),
                wdw=wdw, bdw=bdw.reshape(Cexp, 1),
                w2=w2, b2=b2.reshape(out_planes, 1))


# ----------------------------- pure-JAX reference ----------------------------

def reference_forward(x_nchw, params, *, use_res_connect=True):
    """Reference with the same numerics (bf16 MXU operands, f32 elsewhere)."""
    bs, Cin, H, W = x_nchw.shape
    HW = H * W
    Cexp = params['w1'].shape[0]
    Cout = params['w2'].shape[0]

    xb = x_nchw.reshape(bs, Cin, HW).astype(jnp.bfloat16)
    h = jnp.einsum('ec,bcp->bep', params['w1'], xb,
                   preferred_element_type=jnp.float32) + params['b1'][None]
    h = _hardswish(h)

    hh = h.reshape(bs, Cexp, H, W)
    hp = jnp.pad(hh, ((0, 0), (0, 0), (1, 1), (1, 1)))
    acc = jnp.zeros_like(hh)
    for ky in range(3):
        for kx in range(3):
            w_t = params['wdw'][:, 3 * ky + kx].reshape(1, Cexp, 1, 1)
            acc = acc + hp[:, :, ky:ky + H, kx:kx + W] * w_t
    g = _hardswish(acc.reshape(bs, Cexp, HW) + params['bdw'][None])

    y = jnp.einsum('oe,bep->bop', params['w2'], g.astype(jnp.bfloat16),
                   preferred_element_type=jnp.float32) + params['b2'][None]
    if use_res_connect and Cout == Cin:
        y = y + x_nchw.reshape(bs, Cin, HW).astype(jnp.float32)
    return y.reshape(bs, Cout, H, W).astype(x_nchw.dtype)


# ----------------------------- main ------------------------------------------

if __name__ == "__main__":
    in_planes = 32
    out_planes = 32
    expand_ratio = 4          # expanded_dim = 128
    bs, H, W = 2, 16, 16      # H*W = 256 lanes -> lane-dense I/O

    key = jax.random.PRNGKey(0)
    k_x, k_p = jax.random.split(key)
    # bf16 I/O: activations are bf16 on the MXU anyway; halves HBM traffic.
    x = jax.random.normal(k_x, (bs, in_planes, H, W), jnp.float32).astype(jnp.bfloat16)
    params = init_params(k_p, in_planes, out_planes, expand_ratio)

    out = inverted_residual_forward(x, params, use_res_connect=True)
    out = jax.block_until_ready(out)

    assert out.shape == (bs, out_planes, H, W), out.shape
    assert out.dtype == x.dtype, out.dtype
    assert bool(jnp.all(jnp.isfinite(out.astype(jnp.float32))))

    ref = reference_forward(x, params, use_res_connect=True)
    max_err = float(jnp.max(jnp.abs(out.astype(jnp.float32) - ref.astype(jnp.float32))))
    assert max_err < 1e-2, f"max abs error {max_err}"

    print("KERNEL_OK")
</pallas_src>

<mosaic_0001>
module attributes {stable_mosaic.version = 11 : i64} {
  func.func @_inverted_residual_kernel(%arg0: i32, %arg1: i32, %arg2: memref<1x32x256xbf16, #tpu.memory_space<vmem>>, %arg3: memref<9x256xf32, #tpu.memory_space<vmem>>, %arg4: memref<32x32xbf16, #tpu.memory_space<vmem>>, %arg5: memref<32x1xf32, #tpu.memory_space<vmem>>, %arg6: memref<32x9xf32, #tpu.memory_space<vmem>>, %arg7: memref<32x1xf32, #tpu.memory_space<vmem>>, %arg8: memref<32x128xbf16, #tpu.memory_space<vmem>>, %arg9: memref<32x1xf32, #tpu.memory_space<vmem>>, %arg10: memref<1x32x256xbf16, #tpu.memory_space<vmem>>, %arg11: memref<128x256xbf16, #tpu.memory_space<vmem>>) attributes {dimension_semantics = [#tpu.dimension_semantics<parallel>, #tpu.dimension_semantics<arbitrary>], iteration_bounds = array<i64: 2, 4>, scalar_prefetch = 0 : i64, scratch_operands = 1 : i64, tpu.core_type = #tpu.core_type<tc>, window_params = [{transform_indices = @transform_0, window_bounds = array<i64: 1, 32, 256>}, {pipeline_mode = #tpu.pipeline_mode<synchronous>, transform_indices = @transform_1, window_bounds = array<i64: 9, 256>}, {transform_indices = @transform_2, window_bounds = array<i64: 32, 32>}, {transform_indices = @transform_3, window_bounds = array<i64: 32, 1>}, {transform_indices = @transform_4, window_bounds = array<i64: 32, 9>}, {transform_indices = @transform_5, window_bounds = array<i64: 32, 1>}, {pipeline_mode = #tpu.pipeline_mode<synchronous>, transform_indices = @transform_6, window_bounds = array<i64: 32, 128>}, {pipeline_mode = #tpu.pipeline_mode<synchronous>, transform_indices = @transform_7, window_bounds = array<i64: 32, 1>}, {transform_indices = @transform_8, window_bounds = array<i64: 1, 32, 256>}]} {
    %c0 = arith.constant 0 : index
    %c0_0 = arith.constant 0 : index
    %c0_1 = arith.constant 0 : index
    %0 = vector.load %arg2[%c0, %c0_0, %c0_1] : memref<1x32x256xbf16, #tpu.memory_space<vmem>>, vector<1x32x256xbf16>
    %1 = vector.shape_cast %0 : vector<1x32x256xbf16> to vector<32x256xbf16>
    %c0_2 = arith.constant 0 : index
    %c0_3 = arith.constant 0 : index
    %2 = vector.load %arg4[%c0_2, %c0_3] : memref<32x32xbf16, #tpu.memory_space<vmem>>, vector<32x32xbf16>
    %cst = arith.constant dense<0.000000e+00> : vector<32x256xf32>
    %3 = tpu.matmul %2, %1, %cst {dimension_numbers = #tpu.dot_dimension_numbers<[1], [0], [0], [1], [0, 0, 1, 1], [], []>} : vector<32x32xbf16>, vector<32x256xbf16>, vector<32x256xf32> -> vector<32x256xf32>
    %c0_4 = arith.constant 0 : index
    %c0_5 = arith.constant 0 : index
    %4 = vector.load %arg5[%c0_4, %c0_5] : memref<32x1xf32, #tpu.memory_space<vmem>>, vector<32x1xf32>
    %5 = vector.broadcast %4 : vector<32x1xf32> to vector<32x256xf32>
    %6 = arith.addf %3, %5 : vector<32x256xf32>
    %cst_6 = arith.constant 3.000000e+00 : f32
    %7 = vector.broadcast %cst_6 : f32 to vector<32x256xf32>
    %8 = arith.addf %6, %7 : vector<32x256xf32>
    %cst_7 = arith.constant 0.000000e+00 : f32
    %cst_8 = arith.constant 6.000000e+00 : f32
    %9 = vector.broadcast %cst_7 : f32 to vector<32x256xf32>
    %10 = arith.maximumf %9, %8 : vector<32x256xf32>
    %11 = vector.broadcast %cst_8 : f32 to vector<32x256xf32>
    %12 = arith.minimumf %11, %10 : vector<32x256xf32>
    %13 = arith.mulf %6, %12 : vector<32x256xf32>
    %cst_9 = arith.constant 0.166666672 : f32
    %14 = vector.broadcast %cst_9 : f32 to vector<32x256xf32>
    %15 = arith.mulf %13, %14 : vector<32x256xf32>
    %cst_10 = arith.constant 0.000000e+00 : f32
    %16 = vector.broadcast %cst_10 : f32 to vector<32x256xf32>
    %c17_i32 = arith.constant 17 : i32
    %17 = tpu.dynamic_rotate %15 by %c17_i32 dim 1 : vector<32x256xf32>, i32 -> vector<32x256xf32>
    %c0_11 = arith.constant 0 : index
    %c0_12 = arith.constant 0 : index
    %18 = vector.load %arg3[%c0_11, %c0_12] : memref<9x256xf32, #tpu.memory_space<vmem>>, vector<1x256xf32>
    %19 = vector.broadcast %18 : vector<1x256xf32> to vector<32x256xf32>
    %20 = arith.mulf %17, %19 : vector<32x256xf32>
    %c0_13 = arith.constant 0 : index
    %c0_14 = arith.constant 0 : index
    %21 = vector.load %arg6[%c0_13, %c0_14] : memref<32x9xf32, #tpu.memory_space<vmem>>, vector<32x1xf32>
    %22 = vector.broadcast %21 : vector<32x1xf32> to vector<32x256xf32>
    %23 = arith.mulf %20, %22 : vector<32x256xf32>
    %24 = arith.addf %16, %23 : vector<32x256xf32>
    %c16_i32 = arith.constant 16 : i32
    %25 = tpu.dynamic_rotate %15 by %c16_i32 dim 1 : vector<32x256xf32>, i32 -> vector<32x256xf32>
    %c1 = arith.constant 1 : index
    %c0_15 = arith.constant 0 : index
    %26 = vector.load %arg3[%c1, %c0_15] : memref<9x256xf32, #tpu.memory_space<vmem>>, vector<1x256xf32>
    %27 = vector.broadcast %26 : vector<1x256xf32> to vector<32x256xf32>
    %28 = arith.mulf %25, %27 : vector<32x256xf32>
    %c0_16 = arith.constant 0 : index
    %c1_17 = arith.constant 1 : index
    %29 = vector.load %arg6[%c0_16, %c1_17] : memref<32x9xf32, #tpu.memory_space<vmem>>, vector<32x1xf32>
    %30 = vector.broadcast %29 : vector<32x1xf32> to vector<32x256xf32>
    %31 = arith.mulf %28, %30 : vector<32x256xf32>
    %32 = arith.addf %24, %31 : vector<32x256xf32>
    %c15_i32 = arith.constant 15 : i32
    %33 = tpu.dynamic_rotate %15 by %c15_i32 dim 1 : vector<32x256xf32>, i32 -> vector<32x256xf32>
    %c2 = arith.constant 2 : index
    %c0_18 = arith.constant 0 : index
    %34 = vector.load %arg3[%c2, %c0_18] : memref<9x256xf32, #tpu.memory_space<vmem>>, vector<1x256xf32>
    %35 = vector.broadcast %34 : vector<1x256xf32> to vector<32x256xf32>
    %36 = arith.mulf %33, %35 : vector<32x256xf32>
    %c0_19 = arith.constant 0 : index
    %c2_20 = arith.constant 2 : index
    %37 = vector.load %arg6[%c0_19, %c2_20] : memref<32x9xf32, #tpu.memory_space<vmem>>, vector<32x1xf32>
    %38 = vector.broadcast %37 : vector<32x1xf32> to vector<32x256xf32>
    %39 = arith.mulf %36, %38 : vector<32x256xf32>
    %40 = arith.addf %32, %39 : vector<32x256xf32>
    %c1_i32 = arith.constant 1 : i32
    %41 = tpu.dynamic_rotate %15 by %c1_i32 dim 1 : vector<32x256xf32>, i32 -> vector<32x256xf32>
    %c3 = arith.constant 3 : index
    %c0_21 = arith.constant 0 : index
    %42 = vector.load %arg3[%c3, %c0_21] : memref<9x256xf32, #tpu.memory_space<vmem>>, vector<1x256xf32>
    %43 = vector.broadcast %42 : vector<1x256xf32> to vector<32x256xf32>
    %44 = arith.mulf %41, %43 : vector<32x256xf32>
    %c0_22 = arith.constant 0 : index
    %c3_23 = arith.constant 3 : index
    %45 = vector.load %arg6[%c0_22, %c3_23] : memref<32x9xf32, #tpu.memory_space<vmem>>, vector<32x1xf32>
    %46 = vector.broadcast %45 : vector<32x1xf32> to vector<32x256xf32>
    %47 = arith.mulf %44, %46 : vector<32x256xf32>
    %48 = arith.addf %40, %47 : vector<32x256xf32>
    %c0_24 = arith.constant 0 : index
    %c4 = arith.constant 4 : index
    %49 = vector.load %arg6[%c0_24, %c4] : memref<32x9xf32, #tpu.memory_space<vmem>>, vector<32x1xf32>
    %50 = vector.broadcast %49 : vector<32x1xf32> to vector<32x256xf32>
    %51 = arith.mulf %15, %50 : vector<32x256xf32>
    %52 = arith.addf %48, %51 : vector<32x256xf32>
    %c255_i32 = arith.constant 255 : i32
    %53 = tpu.dynamic_rotate %15 by %c255_i32 dim 1 : vector<32x256xf32>, i32 -> vector<32x256xf32>
    %c5 = arith.constant 5 : index
    %c0_25 = arith.constant 0 : index
    %54 = vector.load %arg3[%c5, %c0_25] : memref<9x256xf32, #tpu.memory_space<vmem>>, vector<1x256xf32>
    %55 = vector.broadcast %54 : vector<1x256xf32> to vector<32x256xf32>
    %56 = arith.mulf %53, %55 : vector<32x256xf32>
    %c0_26 = arith.constant 0 : index
    %c5_27 = arith.constant 5 : index
    %57 = vector.load %arg6[%c0_26, %c5_27] : memref<32x9xf32, #tpu.memory_space<vmem>>, vector<32x1xf32>
    %58 = vector.broadcast %57 : vector<32x1xf32> to vector<32x256xf32>
    %59 = arith.mulf %56, %58 : vector<32x256xf32>
    %60 = arith.addf %52, %59 : vector<32x256xf32>
    %c241_i32 = arith.constant 241 : i32
    %61 = tpu.dynamic_rotate %15 by %c241_i32 dim 1 : vector<32x256xf32>, i32 -> vector<32x256xf32>
    %c6 = arith.constant 6 : index
    %c0_28 = arith.constant 0 : index
    %62 = vector.load %arg3[%c6, %c0_28] : memref<9x256xf32, #tpu.memory_space<vmem>>, vector<1x256xf32>
    %63 = vector.broadcast %62 : vector<1x256xf32> to vector<32x256xf32>
    %64 = arith.mulf %61, %63 : vector<32x256xf32>
    %c0_29 = arith.constant 0 : index
    %c6_30 = arith.constant 6 : index
    %65 = vector.load %arg6[%c0_29, %c6_30] : memref<32x9xf32, #tpu.memory_space<vmem>>, vector<32x1xf32>
    %66 = vector.broadcast %65 : vector<32x1xf32> to vector<32x256xf32>
    %67 = arith.mulf %64, %66 : vector<32x256xf32>
    %68 = arith.addf %60, %67 : vector<32x256xf32>
    %c240_i32 = arith.constant 240 : i32
    %69 = tpu.dynamic_rotate %15 by %c240_i32 dim 1 : vector<32x256xf32>, i32 -> vector<32x256xf32>
    %c7 = arith.constant 7 : index
    %c0_31 = arith.constant 0 : index
    %70 = vector.load %arg3[%c7, %c0_31] : memref<9x256xf32, #tpu.memory_space<vmem>>, vector<1x256xf32>
    %71 = vector.broadcast %70 : vector<1x256xf32> to vector<32x256xf32>
    %72 = arith.mulf %69, %71 : vector<32x256xf32>
    %c0_32 = arith.constant 0 : index
    %c7_33 = arith.constant 7 : index
    %73 = vector.load %arg6[%c0_32, %c7_33] : memref<32x9xf32, #tpu.memory_space<vmem>>, vector<32x1xf32>
    %74 = vector.broadcast %73 : vector<32x1xf32> to vector<32x256xf32>
    %75 = arith.mulf %72, %74 : vector<32x256xf32>
    %76 = arith.addf %68, %75 : vector<32x256xf32>
    %c239_i32 = arith.constant 239 : i32
    %77 = tpu.dynamic_rotate %15 by %c239_i32 dim 1 : vector<32x256xf32>, i32 -> vector<32x256xf32>
    %c8 = arith.constant 8 : index
    %c0_34 = arith.constant 0 : index
    %78 = vector.load %arg3[%c8, %c0_34] : memref<9x256xf32, #tpu.memory_space<vmem>>, vector<1x256xf32>
    %79 = vector.broadcast %78 : vector<1x256xf32> to vector<32x256xf32>
    %80 = arith.mulf %77, %79 : vector<32x256xf32>
    %c0_35 = arith.constant 0 : index
    %c8_36 = arith.constant 8 : index
    %81 = vector.load %arg6[%c0_35, %c8_36] : memref<32x9xf32, #tpu.memory_space<vmem>>, vector<32x1xf32>
    %82 = vector.broadcast %81 : vector<32x1xf32> to vector<32x256xf32>
    %83 = arith.mulf %80, %82 : vector<32x256xf32>
    %84 = arith.addf %76, %83 : vector<32x256xf32>
    %c0_37 = arith.constant 0 : index
    %c0_38 = arith.constant 0 : index
    %85 = vector.load %arg7[%c0_37, %c0_38] : memref<32x1xf32, #tpu.memory_space<vmem>>, vector<32x1xf32>
    %86 = vector.broadcast %85 : vector<32x1xf32> to vector<32x256xf32>
    %87 = arith.addf %84, %86 : vector<32x256xf32>
    %cst_39 = arith.constant 3.000000e+00 : f32
    %88 = vector.broadcast %cst_39 : f32 to vector<32x256xf32>
    %89 = arith.addf %87, %88 : vector<32x256xf32>
    %cst_40 = arith.constant 0.000000e+00 : f32
    %cst_41 = arith.constant 6.000000e+00 : f32
    %90 = vector.broadcast %cst_40 : f32 to vector<32x256xf32>
    %91 = arith.maximumf %90, %89 : vector<32x256xf32>
    %92 = vector.broadcast %cst_41 : f32 to vector<32x256xf32>
    %93 = arith.minimumf %92, %91 : vector<32x256xf32>
    %94 = arith.mulf %87, %93 : vector<32x256xf32>
    %cst_42 = arith.constant 0.166666672 : f32
    %95 = vector.broadcast %cst_42 : f32 to vector<32x256xf32>
    %96 = arith.mulf %94, %95 : vector<32x256xf32>
    %c32_i32 = arith.constant 32 : i32
    %97 = arith.muli %arg1, %c32_i32 : i32
    %98 = tpu.assume_multiple %97, 32 : i32
    %99 = arith.truncf %96 : vector<32x256xf32> to vector<32x256xbf16>
    %100 = arith.index_cast %98 : i32 to index
    %c0_43 = arith.constant 0 : index
    %101 = vector.load %arg11[%100, %c0_43] : memref<128x256xbf16, #tpu.memory_space<vmem>>, vector<32x256xbf16>
    tpu.vector_store %arg11[%100, %c0_43], %99 {strides = array<i32>} : memref<128x256xbf16, #tpu.memory_space<vmem>>, vector<32x256xbf16>,
    %c3_i32 = arith.constant 3 : i32
    %102 = arith.cmpi eq, %arg1, %c3_i32 : i32
    %103 = arith.extui %102 : i1 to i32
    %c0_i32 = arith.constant 0 : i32
    %104 = arith.cmpi ne, %103, %c0_i32 : i32
    scf.if %104 {
      %c0_44 = arith.constant 0 : index
      %c0_45 = arith.constant 0 : index
      %105 = vector.load %arg8[%c0_44, %c0_45] : memref<32x128xbf16, #tpu.memory_space<vmem>>, vector<32x128xbf16>
      %c0_46 = arith.constant 0 : index
      %c0_47 = arith.constant 0 : index
      %106 = vector.load %arg11[%c0_46, %c0_47] : memref<128x256xbf16, #tpu.memory_space<vmem>>, vector<128x256xbf16>
      %cst_48 = arith.constant dense<0.000000e+00> : vector<32x256xf32>
      %107 = tpu.matmul %105, %106, %cst_48 {dimension_numbers = #tpu.dot_dimension_numbers<[1], [0], [0], [1], [0, 0, 1, 1], [], []>} : vector<32x128xbf16>, vector<128x256xbf16>, vector<32x256xf32> -> vector<32x256xf32>
      %c0_49 = arith.constant 0 : index
      %c0_50 = arith.constant 0 : index
      %108 = vector.load %arg9[%c0_49, %c0_50] : memref<32x1xf32, #tpu.memory_space<vmem>>, vector<32x1xf32>
      %109 = vector.broadcast %108 : vector<32x1xf32> to vector<32x256xf32>
      %110 = arith.addf %107, %109 : vector<32x256xf32>
      %111 = arith.extf %1 : vector<32x256xbf16> to vector<32x256xf32>
      %112 = arith.addf %110, %111 : vector<32x256xf32>
      %113 = arith.truncf %112 : vector<32x256xf32> to vector<32x256xbf16>
      %c0_51 = arith.constant 0 : index
      %c0_52 = arith.constant 0 : index
      %c0_53 = arith.constant 0 : index
      %114 = vector.load %arg10[%c0_51, %c0_52, %c0_53] : memref<1x32x256xbf16, #tpu.memory_space<vmem>>, vector<1x32x256xbf16>
      %115 = vector.shape_cast %114 : vector<1x32x256xbf16> to vector<32x256xbf16>
      %116 = vector.shape_cast %113 : vector<32x256xbf16> to vector<1x32x256xbf16>
      tpu.vector_store %arg10[%c0_51, %c0_52, %c0_53], %116 {strides = array<i32>} : memref<1x32x256xbf16, #tpu.memory_space<vmem>>, vector<1x32x256xbf16>,
    } else {
    }
    return
  }
  func.func @transform_0(%arg0: i32, %arg1: i32) -> (i32, i32, i32) {
    %c0_i32 = arith.constant 0 : i32
    %c0_i32_0 = arith.constant 0 : i32
    %c0_i32_1 = arith.constant 0 : i32
    return %arg0, %c0_i32, %c0_i32_0 : i32, i32, i32
  }
  func.func @transform_1(%arg0: i32, %arg1: i32) -> (i32, i32) {
    %c0_i32 = arith.constant 0 : i32
    %c0_i32_0 = arith.constant 0 : i32
    %c0_i32_1 = arith.constant 0 : i32
    return %c0_i32, %c0_i32_0 : i32, i32
  }
  func.func @transform_2(%arg0: i32, %arg1: i32) -> (i32, i32) {
    %c0_i32 = arith.constant 0 : i32
    %c0_i32_0 = arith.constant 0 : i32
    return %arg1, %c0_i32 : i32, i32
  }
  func.func @transform_3(%arg0: i32, %arg1: i32) -> (i32, i32) {
    %c0_i32 = arith.constant 0 : i32
    %c0_i32_0 = arith.constant 0 : i32
    return %arg1, %c0_i32 : i32, i32
  }
  func.func @transform_4(%arg0: i32, %arg1: i32) -> (i32, i32) {
    %c0_i32 = arith.constant 0 : i32
    %c0_i32_0 = arith.constant 0 : i32
    return %arg1, %c0_i32 : i32, i32
  }
  func.func @transform_5(%arg0: i32, %arg1: i32) -> (i32, i32) {
    %c0_i32 = arith.constant 0 : i32
    %c0_i32_0 = arith.constant 0 : i32
    return %arg1, %c0_i32 : i32, i32
  }
  func.func @transform_6(%arg0: i32, %arg1: i32) -> (i32, i32) {
    %c0_i32 = arith.constant 0 : i32
    %c0_i32_0 = arith.constant 0 : i32
    %c0_i32_1 = arith.constant 0 : i32
    return %c0_i32, %c0_i32_0 : i32, i32
  }
  func.func @transform_7(%arg0: i32, %arg1: i32) -> (i32, i32) {
    %c0_i32 = arith.constant 0 : i32
    %c0_i32_0 = arith.constant 0 : i32
    %c0_i32_1 = arith.constant 0 : i32
    return %c0_i32, %c0_i32_0 : i32, i32
  }
  func.func @transform_8(%arg0: i32, %arg1: i32) -> (i32, i32, i32) {
    %c0_i32 = arith.constant 0 : i32
    %c0_i32_0 = arith.constant 0 : i32
    %c0_i32_1 = arith.constant 0 : i32
    return %arg0, %c0_i32, %c0_i32_0 : i32, i32, i32
  }
}

</mosaic_0001>

<llo_original>
// kernel: tpu_custom_call.1
$region0: #{tpu_custom_call.1}
  #allocation0 [shape = 'u32[]', space=smem, size = 0x4, offset = 0x4, fixed_abs, tag = 'smem constant byte address 0x4 - core index']
  #allocation1 [shape = 'u32[144,128]{1,0:T(1,128)}', space=vmem, size = 0x12000, scoped, tag = 'internal scratch']
  #allocation2 [shape = 'bf16[128,256]{1,0:T(16,128)(2,1)}', space=vmem, size = 0x10000, scoped, tag = 'scratch operand']
  %s0 = inlined_call_operand.vmem [shape: bf16[2,32,256], index: 0, kind: input, shape index: {}]
  %s1 = inlined_call_operand.vmem [shape: f32[9,256], index: 1, kind: input, shape index: {}]
  %s2 = inlined_call_operand.vmem [shape: bf16[128,32], index: 2, kind: input, shape index: {}]
  %s3 = inlined_call_operand.vmem [shape: f32[128,1], index: 3, kind: input, shape index: {}]
  %s4 = inlined_call_operand.vmem [shape: f32[128,9], index: 4, kind: input, shape index: {}]
  %s5 = inlined_call_operand.vmem [shape: f32[128,1], index: 5, kind: input, shape index: {}]
  %s6 = inlined_call_operand.vmem [shape: bf16[32,128], index: 6, kind: input, shape index: {}]
  %s7 = inlined_call_operand.vmem [shape: f32[32,1], index: 7, kind: input, shape index: {}]
  %s8 = inlined_call_operand.hbm [shape: bf16[2,32,256], index: 8, kind: output, shape index: {}]
  %s9 = sld [smem:[#allocation0]]
  $region69: #{tpu_custom_call.1} parent=0
    _
  %s11 = ssub.s32 1, %s9
  %s12 = scalar_select 0, %s11, %s9
  $region1: #{tpu_custom_call.1} parent=0
    #allocation3 [shape = 'u8[32768]{0}', space=vmem, size = 0x8000, scoped, tag = 'output window, operand 0']
    #allocation4 [shape = 's32[2]{0}', space=sflag, size = 0x8, scoped, tag = 'scoped memory for tpu_custom_call.1']
    %13 = vsyncpa [#allocation4], 0
    %s14 = scalar_lea.sflag [#allocation4], 1
    %15 = vsyncpa %s14, 0
    loop: start=0, step=1, limit=10
    $region2: #{tpu_custom_call.1} parent=1 // loop_pre_header
      _
    $region3: #{tpu_custom_call.1} parent=1 // loop_header
      %s17 = sphi 0, %s21
      %p18 = scmp.ge.s32.totalorder %s17, 10
      %s24 = sphi 0, %s36
      %s25 = sphi 0, %s32
      %s26 = sphi 0, %s24
      %s27 = sphi 0, %s25
      %s28 = sphi 0, %s26
      %s29 = sphi 0, %s27
      %s39 = sphi 0, %s41
      %s42 = sphi 0, %s39
      %s43 = sphi 0, %s42
      %s59 = sphi 0, %s43
      %s63 = sphi 0, %s63
      %s65 = sphi 0, %s63
      %s66 = sphi 0, %s65
      %s80 = sphi 0, %s66
      %s86 = sphi 0, %s88
      %s89 = sphi 0, %s86
      %s90 = sphi 0, %s89
      %s106 = sphi 0, %s90
      %s112 = sphi 0, %s114
      %s115 = sphi 0, %s112
      %s116 = sphi 0, %s115
      %s132 = sphi 0, %s116
      %s138 = sphi 0, %s140
      %s141 = sphi 0, %s138
      %s142 = sphi 0, %s141
      %s158 = sphi 0, %s142
      %s164 = sphi 0, %s166
      %s167 = sphi 0, %s164
      %s168 = sphi 0, %s167
      %s184 = sphi 0, %s168
      %s188 = sphi 0, %s188
      %s190 = sphi 0, %s188
      %s191 = sphi 0, %s190
      %s205 = sphi 0, %s191
      %s209 = sphi 0, %s209
      %s211 = sphi 0, %s209
      %s212 = sphi 0, %s211
      %s226 = sphi 0, %s212
      %s232 = sphi 0, %s234
      %s235 = sphi 0, %s232
      %s236 = sphi 0, %s235
      %s252 = sphi 0, %s236
    $region4: #{tpu_custom_call.1} parent=1 // loop_header_branch
      %20 = sbr.rel (%p18) target = $region8
    $region5: #{tpu_custom_call.1} parent=1 // loop_body
      %s22 = ssub.s32 %s17, 1
      %s23 = ssub.s32 %s17, 2
      %s30 = sadd.s32 1, %s25
      %p31 = scmp.ge.s32.totalorder %s30, 4
      %s32 = scalar_select %p31, 0, %s30
      %s33 = sadd.s32 1, %s24
      %s34 = scalar_select %p31, %s33, %s24
      %p35 = scmp.ge.s32.totalorder %s34, 2
      %s36 = scalar_select %p35, 0, %s34
      %s37 = ssub.s32 %s24, %s36
      %p38 = scmp.eq.s32.totalorder %s37, 0
      %s40 = sadd.s32 %s39, 1
      %s41 = scalar_select %p38, %s39, %s40
      %p44 = pneg %p38
      %p45 = scmp.eq.s32.totalorder %s17, 7
      %p46 = por %p44, %p45
      %p47 = scmp.ne.s32.totalorder %s39, %s42
      %p48 = scmp.eq.s32.totalorder %s17, 0
      %p49 = por %p47, %p48
      %p50 = scmp.ne.s32.totalorder %s39, %s42
      %p51 = scmp.eq.s32.totalorder %s22, 7
      %p52 = por %p50, %p51
      %p53 = scmp.ne.s32.totalorder %s42, %s43
      %p54 = scmp.eq.s32.totalorder %s22, 0
      %p55 = por %p53, %p54
      %p56 = scmp.ne.s32.totalorder %s42, %s43
      %p57 = scmp.eq.s32.totalorder %s23, 7
      %p58 = por %p56, %p57
      %p60 = scmp.ne.s32.totalorder %s43, %s59
      %p61 = scmp.eq.s32.totalorder %s23, 0
      %p62 = por %p60, %p61
      %s64 = sadd.s32 %s63, 1
      %p67 = scmp.eq.s32.totalorder %s17, 7
      %p68 = scmp.ne.s32.totalorder %s63, %s65
      %p69 = scmp.eq.s32.totalorder %s17, 0
      %p70 = por %p68, %p69
      %p71 = scmp.ne.s32.totalorder %s63, %s65
      %p72 = scmp.eq.s32.totalorder %s22, 7
      %p73 = por %p71, %p72
      %p74 = scmp.ne.s32.totalorder %s65, %s66
      %p75 = scmp.eq.s32.totalorder %s22, 0
      %p76 = por %p74, %p75
      %p77 = scmp.ne.s32.totalorder %s65, %s66
      %p78 = scmp.eq.s32.totalorder %s23, 7
      %p79 = por %p77, %p78
      %p81 = scmp.ne.s32.totalorder %s66, %s80
      %p82 = scmp.eq.s32.totalorder %s23, 0
      %p83 = por %p81, %p82
      %s84 = ssub.s32 %s25, %s32
      %p85 = scmp.eq.s32.totalorder %s84, 0
      %s87 = sadd.s32 %s86, 1
      %s88 = scalar_select %p85, %s86, %s87
      %p91 = pneg %p85
      %p92 = scmp.eq.s32.totalorder %s17, 7
      %p93 = por %p91, %p92
      %p94 = scmp.ne.s32.totalorder %s86, %s89
      %p95 = scmp.eq.s32.totalorder %s17, 0
      %p96 = por %p94, %p95
      %p97 = scmp.ne.s32.totalorder %s86, %s89
      %p98 = scmp.eq.s32.totalorder %s22, 7
      %p99 = por %p97, %p98
      %p100 = scmp.ne.s32.totalorder %s89, %s90
      %p101 = scmp.eq.s32.totalorder %s22, 0
      %p102 = por %p100, %p101
      %p103 = scmp.ne.s32.totalorder %s89, %s90
      %p104 = scmp.eq.s32.totalorder %s23, 7
      %p105 = por %p103, %p104
      %p107 = scmp.ne.s32.totalorder %s90, %s106
      %p108 = scmp.eq.s32.totalorder %s23, 0
      %p109 = por %p107, %p108
      %s110 = ssub.s32 %s25, %s32
      %p111 = scmp.eq.s32.totalorder %s110, 0
      %s113 = sadd.s32 %s112, 1
      %s114 = scalar_select %p111, %s112, %s113
      %p117 = pneg %p111
      %p118 = scmp.eq.s32.totalorder %s17, 7
      %p119 = por %p117, %p118
      %p120 = scmp.ne.s32.totalorder %s112, %s115
      %p121 = scmp.eq.s32.totalorder %s17, 0
      %p122 = por %p120, %p121
      %p123 = scmp.ne.s32.totalorder %s112, %s115
      %p124 = scmp.eq.s32.totalorder %s22, 7
      %p125 = por %p123, %p124
      %p126 = scmp.ne.s32.totalorder %s115, %s116
      %p127 = scmp.eq.s32.totalorder %s22, 0
      %p128 = por %p126, %p127
      %p129 = scmp.ne.s32.totalorder %s115, %s116
      %p130 = scmp.eq.s32.totalorder %s23, 7
      %p131 = por %p129, %p130
      %p133 = scmp.ne.s32.totalorder %s116, %s132
      %p134 = scmp.eq.s32.totalorder %s23, 0
      %p135 = por %p133, %p134
      %s136 = ssub.s32 %s25, %s32
      %p137 = scmp.eq.s32.totalorder %s136, 0
      %s139 = sadd.s32 %s138, 1
      %s140 = scalar_select %p137, %s138, %s139
      %p143 = pneg %p137
      %p144 = scmp.eq.s32.totalorder %s17, 7
      %p145 = por %p143, %p144
      %p146 = scmp.ne.s32.totalorder %s138, %s141
      %p147 = scmp.eq.s32.totalorder %s17, 0
      %p148 = por %p146, %p147
      %p149 = scmp.ne.s32.totalorder %s138, %s141
      %p150 = scmp.eq.s32.totalorder %s22, 7
      %p151 = por %p149, %p150
      %p152 = scmp.ne.s32.totalorder %s141, %s142
      %p153 = scmp.eq.s32.totalorder %s22, 0
      %p154 = por %p152, %p153
      %p155 = scmp.ne.s32.totalorder %s141, %s142
      %p156 = scmp.eq.s32.totalorder %s23, 7
      %p157 = por %p155, %p156
      %p159 = scmp.ne.s32.totalorder %s142, %s158
      %p160 = scmp.eq.s32.totalorder %s23, 0
      %p161 = por %p159, %p160
      %s162 = ssub.s32 %s25, %s32
      %p163 = scmp.eq.s32.totalorder %s162, 0
      %s165 = sadd.s32 %s164, 1
      %s166 = scalar_select %p163, %s164, %s165
      %p169 = pneg %p163
      %p170 = scmp.eq.s32.totalorder %s17, 7
      %p171 = por %p169, %p170
      %p172 = scmp.ne.s32.totalorder %s164, %s167
      %p173 = scmp.eq.s32.totalorder %s17, 0
      %p174 = por %p172, %p173
      %p175 = scmp.ne.s32.totalorder %s164, %s167
      %p176 = scmp.eq.s32.totalorder %s22, 7
      %p177 = por %p175, %p176
      %p178 = scmp.ne.s32.totalorder %s167, %s168
      %p179 = scmp.eq.s32.totalorder %s22, 0
      %p180 = por %p178, %p179
      %p181 = scmp.ne.s32.totalorder %s167, %s168
      %p182 = scmp.eq.s32.totalorder %s23, 7
      %p183 = por %p181, %p182
      %p185 = scmp.ne.s32.totalorder %s168, %s184
      %p186 = scmp.eq.s32.totalorder %s23, 0
      %p187 = por %p185, %p186
      %s189 = sadd.s32 %s188, 1
      %p192 = scmp.eq.s32.totalorder %s17, 7
      %p193 = scmp.ne.s32.totalorder %s188, %s190
      %p194 = scmp.eq.s32.totalorder %s17, 0
      %p195 = por %p193, %p194
      %p196 = scmp.ne.s32.totalorder %s188, %s190
      %p197 = scmp.eq.s32.totalorder %s22, 7
      %p198 = por %p196, %p197
      %p199 = scmp.ne.s32.totalorder %s190, %s191
      %p200 = scmp.eq.s32.totalorder %s22, 0
      %p201 = por %p199, %p200
      %p202 = scmp.ne.s32.totalorder %s190, %s191
      %p203 = scmp.eq.s32.totalorder %s23, 7
      %p204 = por %p202, %p203
      %p206 = scmp.ne.s32.totalorder %s191, %s205
      %p207 = scmp.eq.s32.totalorder %s23, 0
      %p208 = por %p206, %p207
      %s210 = sadd.s32 %s209, 1
      %p213 = scmp.eq.s32.totalorder %s17, 7
      %p214 = scmp.ne.s32.totalorder %s209, %s211
      %p215 = scmp.eq.s32.totalorder %s17, 0
      %p216 = por %p214, %p215
      %p217 = scmp.ne.s32.totalorder %s209, %s211
      %p218 = scmp.eq.s32.totalorder %s22, 7
      %p219 = por %p217, %p218
      %p220 = scmp.ne.s32.totalorder %s211, %s212
      %p221 = scmp.eq.s32.totalorder %s22, 0
      %p222 = por %p220, %p221
      %p223 = scmp.ne.s32.totalorder %s211, %s212
      %p224 = scmp.eq.s32.totalorder %s23, 7
      %p225 = por %p223, %p224
      %p227 = scmp.ne.s32.totalorder %s212, %s226
      %p228 = scmp.eq.s32.totalorder %s23, 0
      %p229 = por %p227, %p228
      %s230 = ssub.s32 %s24, %s36
      %p231 = scmp.eq.s32.totalorder %s230, 0
      %s233 = sadd.s32 %s232, 1
      %s234 = scalar_select %p231, %s232, %s233
      %p237 = pneg %p231
      %p238 = scmp.eq.s32.totalorder %s17, 7
      %p239 = por %p237, %p238
      %p240 = scmp.ne.s32.totalorder %s232, %s235
      %p241 = scmp.eq.s32.totalorder %s17, 0
      %p242 = por %p240, %p241
      %p243 = scmp.ne.s32.totalorder %s232, %s235
      %p244 = scmp.eq.s32.totalorder %s22, 7
      %p245 = por %p243, %p244
      %p246 = scmp.ne.s32.totalorder %s235, %s236
      %p247 = scmp.eq.s32.totalorder %s22, 0
      %p248 = por %p246, %p247
      %p249 = scmp.ne.s32.totalorder %s235, %s236
      %p250 = scmp.eq.s32.totalorder %s23, 7
      %p251 = por %p249, %p250
      %p253 = scmp.ne.s32.totalorder %s236, %s252
      %p254 = scmp.eq.s32.totalorder %s23, 0
      %p255 = por %p253, %p254
      %p256 = scmp.le.s32.totalorder 1, %s17
      %p257 = scmp.lt.s32.totalorder %s17, 9
      %p258 = pnand %p256, %p257
      %p259 = pneg %p258
      // Predicated region
      $region9: #{tpu_custom_call.1} parent=5 // pred_check
        _
      $region10: #{tpu_custom_call.1} parent=5 // pred_check_branch
        %261 = sbr.rel (%p258) target = $region12
      $region11: #{tpu_custom_call.1} parent=5 // pred_region
        %s262 = ssub.s32 %s17, 1
        // Predicated region
        $region13: #{tpu_custom_call.1} parent=11 // pred_check
          %p263 = pneg %p76
        $region14: #{tpu_custom_call.1} parent=11 // pred_check_branch
          %265 = sbr.rel (%p263) target = $region16
        $region15: #{tpu_custom_call.1} parent=11 // pred_region
          _
        $region16: #{tpu_custom_call.1} parent=11 // pred_fallthru
          _
        // Predicated region
        $region17: #{tpu_custom_call.1} parent=11 // pred_check
          %p266 = pneg %p201
        $region18: #{tpu_custom_call.1} parent=11 // pred_check_branch
          %268 = sbr.rel (%p266) target = $region20
        $region19: #{tpu_custom_call.1} parent=11 // pred_region
          _
        $region20: #{tpu_custom_call.1} parent=11 // pred_fallthru
          _
        // Predicated region
        $region21: #{tpu_custom_call.1} parent=11 // pred_check
          %p269 = pneg %p222
        $region22: #{tpu_custom_call.1} parent=11 // pred_check_branch
          %271 = sbr.rel (%p269) target = $region24
        $region23: #{tpu_custom_call.1} parent=11 // pred_region
          _
        $region24: #{tpu_custom_call.1} parent=11 // pred_fallthru
          _
      $region12: #{tpu_custom_call.1} parent=5 // pred_fallthru
        _
      %p272 = scmp.lt.s32.totalorder %s17, 8
      // Predicated region
      $region25: #{tpu_custom_call.1} parent=5 // pred_check
        %p273 = pneg %p272
      $region26: #{tpu_custom_call.1} parent=5 // pred_check_branch
        %275 = sbr.rel (%p273) target = $region28
      $region27: #{tpu_custom_call.1} parent=5 // pred_region
        // Predicated region
        $region29: #{tpu_custom_call.1} parent=27 // pred_check
          %p276 = pneg %p49
        $region30: #{tpu_custom_call.1} parent=27 // pred_check_branch
          %278 = sbr.rel (%p276) target = $region32
        $region31: #{tpu_custom_call.1} parent=27 // pred_region
          %p279 = scmp.lt.s32.totalorder %s24, 1
          %s280 = scalar_select %p279, %s24, 1
          %s281 = smul.addr %s280, 8
          %s282 = smul.addr %s281, 4
          %s283 = scalar_lea.vmem %s0, %s282
        $region32: #{tpu_custom_call.1} parent=27 // pred_fallthru
          _
        // Predicated region
        $region33: #{tpu_custom_call.1} parent=27 // pred_check
          %p284 = pneg %p96
        $region34: #{tpu_custom_call.1} parent=27 // pred_check_branch
          %286 = sbr.rel (%p284) target = $region36
        $region35: #{tpu_custom_call.1} parent=27 // pred_region
          %s287 = smul.u32 4, %s25
          %p288 = scmp.lt.s32.totalorder %s287, 15
          %s289 = scalar_select %p288, %s287, 15
          %s290 = smul.addr %s289, 4
          %s291 = scalar_lea.vmem %s2, %s290
          %s292 = smul.u32 4, %s25
        $region36: #{tpu_custom_call.1} parent=27 // pred_fallthru
          _
        // Predicated region
        $region37: #{tpu_custom_call.1} parent=27 // pred_check
          %p293 = pneg %p122
        $region38: #{tpu_custom_call.1} parent=27 // pred_check_branch
          %295 = sbr.rel (%p293) target = $region40
        $region39: #{tpu_custom_call.1} parent=27 // pred_region
          %s296 = smul.u32 4, %s25
          %p297 = scmp.lt.s32.totalorder %s296, 15
          %s298 = scalar_select %p297, %s296, 15
          %s299 = smul.addr %s298, 8
          %s300 = scalar_lea.vmem %s3, %s299
          %s301 = smul.u32 4, %s25
        $region40: #{tpu_custom_call.1} parent=27 // pred_fallthru
          _
        // Predicated region
        $region41: #{tpu_custom_call.1} parent=27 // pred_check
          %p302 = pneg %p148
        $region42: #{tpu_custom_call.1} parent=27 // pred_check_branch
          %304 = sbr.rel (%p302) target = $region44
        $region43: #{tpu_custom_call.1} parent=27 // pred_region
          %s305 = smul.u32 4, %s25
          %p306 = scmp.lt.s32.totalorder %s305, 15
          %s307 = scalar_select %p306, %s305, 15
          %s308 = smul.addr %s307, 8
          %s309 = scalar_lea.vmem %s4, %s308
          %s310 = smul.u32 4, %s25
        $region44: #{tpu_custom_call.1} parent=27 // pred_fallthru
          _
        // Predicated region
        $region45: #{tpu_custom_call.1} parent=27 // pred_check
          %p311 = pneg %p174
        $region46: #{tpu_custom_call.1} parent=27 // pred_check_branch
          %313 = sbr.rel (%p311) target = $region48
        $region47: #{tpu_custom_call.1} parent=27 // pred_region
          %s314 = smul.u32 4, %s25
          %p315 = scmp.lt.s32.totalorder %s314, 15
          %s316 = scalar_select %p315, %s314, 15
          %s317 = smul.addr %s316, 8
          %s318 = scalar_lea.vmem %s5, %s317
          %s319 = smul.u32 4, %s25
        $region48: #{tpu_custom_call.1} parent=27 // pred_fallthru
          _
      $region28: #{tpu_custom_call.1} parent=5 // pred_fallthru
        _
      %p320 = scmp.le.s32.totalorder 1, %s17
      %p321 = scmp.lt.s32.totalorder %s17, 9
      %p322 = pnand %p320, %p321
      %p323 = pneg %p322
      // Predicated region
      $region49: #{tpu_custom_call.1} parent=5 // pred_check
        _
      $region50: #{tpu_custom_call.1} parent=5 // pred_check_branch
        %325 = sbr.rel (%p322) target = $region52
      $region51: #{tpu_custom_call.1} parent=5 // pred_region
        %s326 = ssub.s32 %s17, 1
        %p327 = scmp.lt.s32.totalorder %s26, 1
        %s328 = scalar_select %p327, %s26, 1
        %s329 = smul.addr %s328, 8
        %s330 = smul.addr %s329, 4
        %s331 = scalar_lea.vmem %s0, %s330
        %p332 = pneg %p55
        %p333 = pneg %p52
        %p334 = pneg %p76
        %p335 = pneg %p73
        %s336 = smul.u32 4, %s27
        %p337 = scmp.lt.s32.totalorder %s336, 15
        %s338 = scalar_select %p337, %s336, 15
        %s339 = smul.addr %s338, 4
        %s340 = scalar_lea.vmem %s2, %s339
        %p341 = pneg %p102
        %p342 = pneg %p99
        %s343 = smul.u32 4, %s27
        %p344 = scmp.lt.s32.totalorder %s343, 15
        %s345 = scalar_select %p344, %s343, 15
        %s346 = smul.addr %s345, 8
        %s347 = scalar_lea.vmem %s3, %s346
        %p348 = pneg %p128
        %p349 = pneg %p125
        %s350 = smul.u32 4, %s27
        %p351 = scmp.lt.s32.totalorder %s350, 15
        %s352 = scalar_select %p351, %s350, 15
        %s353 = smul.addr %s352, 8
        %s354 = scalar_lea.vmem %s4, %s353
        %p355 = pneg %p154
        %p356 = pneg %p151
        %s357 = smul.u32 4, %s27
        %p358 = scmp.lt.s32.totalorder %s357, 15
        %s359 = scalar_select %p358, %s357, 15
        %s360 = smul.addr %s359, 8
        %s361 = scalar_lea.vmem %s5, %s360
        %p362 = pneg %p180
        %p363 = pneg %p177
        %p364 = pneg %p201
        %p365 = pneg %p198
        %p366 = pneg %p222
        %p367 = pneg %p219
        %p368 = pneg %p248
        %p369 = pneg %p245
        %s370 = sand.u32 %s235, 1
        %s371 = scalar_lea.sflag [#allocation4], %s370
        %s372 = sand.u32 %s235, 1
        %s373 = smul.addr %s372, 32
        %s374 = scalar_lea.vmem [#allocation3], %s373
        %p375 = scmp.lt.s32.totalorder %s26, 1
        %s376 = scalar_select %p375, %s26, 1
        %s377 = smul.addr %s376, 8
        %s378 = smul.addr %s377, 4
        %s379 = scalar_lea.vmem %s0, %s378
        %s380 = smul.u32 4, %s27
        %p381 = scmp.lt.s32.totalorder %s380, 15
        %s382 = scalar_select %p381, %s380, 15
        %s383 = smul.addr %s382, 4
        %s384 = scalar_lea.vmem %s2, %s383
        %s385 = smul.u32 4, %s27
        %s386 = smul.u32 4, %s27
        %p387 = scmp.lt.s32.totalorder %s386, 15
        %s388 = scalar_select %p387, %s386, 15
        %s389 = smul.addr %s388, 8
        %s390 = scalar_lea.vmem %s3, %s389
        %s391 = smul.u32 4, %s27
        %s392 = smul.u32 4, %s27
        %p393 = scmp.lt.s32.totalorder %s392, 15
        %s394 = scalar_select %p393, %s392, 15
        %s395 = smul.addr %s394, 8
        %s396 = scalar_lea.vmem %s4, %s395
        %s397 = smul.u32 4, %s27
        %s398 = smul.u32 4, %s27
        %p399 = scmp.lt.s32.totalorder %s398, 15
        %s400 = scalar_select %p399, %s398, 15
        %s401 = smul.addr %s400, 8
        %s402 = scalar_lea.vmem %s5, %s401
        %s403 = smul.u32 4, %s27
        %v405 = vld [vmem:[%s379] sm:$0xff]
        %v406 = vld [vmem:[%s379 + $0x8] sm:$0xff]
        %v407 = vld [vmem:[%s379 + $0x10] sm:$0xff]
        %v408 = vld [vmem:[%s379 + $0x18] sm:$0xff]
        %v409 = vld [vmem:[%s384] sm:$0xf]
        %v410 = vld [vmem:[%s384 + $0x4] sm:$0xf]
        %v411 = vld [vmem:[%s384 + $0x8] sm:$0xf]
        %v412 = vld [vmem:[%s384 + $0xc] sm:$0xf]
        %v413 = vld [vmem:[%s390] sm:$0xff]
        %v414 = vld [vmem:[%s390 + $0x8] sm:$0xff]
        %v415 = vld [vmem:[%s390 + $0x10] sm:$0xff]
        %v416 = vld [vmem:[%s390 + $0x18] sm:$0xff]
        %418 = vset.pattern.permute.xlu0 0
        %419 = vperm.xlu0 %418, %v413
        %v420 = vpop.permute.xlu0 %419
        %423 = vset.pattern.permute.xlu0 0
        %424 = vperm.xlu0 %423, %v414
        %v425 = vpop.permute.xlu0 %424
        %428 = vset.pattern.permute.xlu0 0
        %429 = vperm.xlu0 %428, %v415
        %v430 = vpop.permute.xlu0 %429
        %433 = vset.pattern.permute.xlu0 0
        %434 = vperm.xlu0 %433, %v416
        %v435 = vpop.permute.xlu0 %434
        %v441 = vunpack.c.l.b16 %v409
        %v442 = vunpack.c.l.b16 %v410
        %v443 = vunpack.c.l.b16 %v411
        %v444 = vunpack.c.l.b16 %v412
        %v445 = vpack.c.b16 %v442, %v441
        %v446 = vpack.c.b16 %v444, %v443
        %v451 = vunpack.c.l.b16 %v405
        %v452 = vunpack.c.h.b16 %v405
        %v453 = vunpack.c.l.b16 %v406
        %v454 = vunpack.c.h.b16 %v406
        %v455 = vunpack.c.l.b16 %v407
        %v456 = vunpack.c.h.b16 %v407
        %v457 = vunpack.c.l.b16 %v408
        %v458 = vunpack.c.h.b16 %v408
        %v459 = vpack.c.b16 %v453, %v451
        %v460 = vpack.c.b16 %v454, %v452
        %v461 = vpack.c.b16 %v457, %v455
        %v462 = vpack.c.b16 %v458, %v456
        %vm467 = vcmask 261120
        %v469 = vsel %vm467, %v445, 0
        %v472 = vsel %vm467, %v446, 0
        %474 = vmatprep.subr.bf16.mxu0 %v460
        %475 = vmatpush1.bf16.msra.mxu0 %v459
        %476 = vmatprep.subr.bf16.mxu0 %v462
        %477 = vmatpush1.bf16.msra.mxu0 %v461
        %478 = vmatprep.subr.bf16.mxu0 0
        %479 = vmatpush1.bf16.msra.mxu0 0
        %480 = vmatprep.subr.bf16.mxu0 0
        %481 = vmatpush1.bf16.msra.mxu0 0
        %482 = vmatprep.subr.bf16.mxu0 0
        %483 = vmatpush1.bf16.msra.mxu0 0
        %484 = vmatprep.subr.bf16.mxu0 0
        %485 = vmatpush1.bf16.msra.mxu0 0
        %486 = vmatprep.subr.bf16.mxu0 0
        %487 = vmatpush1.bf16.msra.mxu0 0
        %488 = vmatprep.subr.bf16.mxu0 0
        %489 = vmatpush1.bf16.msra.mxu0 0
        %490 = vmatprep.subr.bf16.mxu0 0
        %491 = vmatpush1.bf16.msra.mxu0 0
        %492 = vmatprep.subr.bf16.mxu0 0
        %493 = vmatpush1.bf16.msra.mxu0 0
        %494 = vmatprep.subr.bf16.mxu0 0
        %495 = vmatpush1.bf16.msra.mxu0 0
        %496 = vmatprep.subr.bf16.mxu0 0
        %497 = vmatpush1.bf16.msra.mxu0 0
        %498 = vmatprep.subr.bf16.mxu0 0
        %499 = vmatpush1.bf16.msra.mxu0 0
        %500 = vmatprep.subr.bf16.mxu0 0
        %501 = vmatpush1.bf16.msra.mxu0 0
        %502 = vmatprep.subr.bf16.mxu0 0
        %503 = vmatpush1.bf16.msra.mxu0 0
        %504 = vmatprep.subr.bf16.mxu0 0
        %505 = vmatpush1.bf16.msra.mxu0 0
        %506 = vmatprep.mubr.bf16.mxu0 0
        %507 = vmatmul.mubr.bf16.gmra.mrb[0].mxu0 %v469
        %v508 = vpop.f32.mrb[0].mxu0
        %v509 = vadd.f32 %v420, %v508
        %v510 = vpop.f32.mrb[0].mxu0
        %v511 = vadd.f32 %v420, %v510
        %v512 = vpop.f32.mrb[0].mxu0
        %v513 = vadd.f32 %v425, %v512
        %v514 = vpop.f32.mrb[0].mxu0
        %v515 = vadd.f32 %v425, %v514
        %516 = vmatprep.mubr.bf16.mxu0 0
        %517 = vmatmul.mubr.bf16.gmra.mrb[0].mxu0 %v472
        %v518 = vpop.f32.mrb[0].mxu0
        %v519 = vadd.f32 %v430, %v518
        %v520 = vpop.f32.mrb[0].mxu0
        %v521 = vadd.f32 %v430, %v520
        %v522 = vpop.f32.mrb[0].mxu0
        %v523 = vadd.f32 %v435, %v522
        %v524 = vpop.f32.mrb[0].mxu0
        %v525 = vadd.f32 %v435, %v524
        %526 = vdwg.mxu0
        %v527 = vadd.f32 %v509, 3.0
        %v528 = vadd.f32 %v511, 3.0
        %v529 = vadd.f32 %v513, 3.0
        %v530 = vadd.f32 %v515, 3.0
        %v531 = vadd.f32 %v519, 3.0
        %v532 = vadd.f32 %v521, 3.0
        %v533 = vadd.f32 %v523, 3.0
        %v534 = vadd.f32 %v525, 3.0
        %v535 = vmax.f32 %v527, 0.0
        %v536 = vmax.f32 %v528, 0.0
        %v537 = vmax.f32 %v529, 0.0
        %v538 = vmax.f32 %v530, 0.0
        %v539 = vmax.f32 %v531, 0.0
        %v540 = vmax.f32 %v532, 0.0
        %v541 = vmax.f32 %v533, 0.0
        %v542 = vmax.f32 %v534, 0.0
        %v543 = vmin.f32 %v535, 6.0
        %v544 = vmin.f32 %v536, 6.0
        %v545 = vmin.f32 %v537, 6.0
        %v546 = vmin.f32 %v538, 6.0
        %v547 = vmin.f32 %v539, 6.0
        %v548 = vmin.f32 %v540, 6.0
        %v549 = vmin.f32 %v541, 6.0
        %v550 = vmin.f32 %v542, 6.0
        %v551 = vmul.f32 %v509, %v543
        %v552 = vmul.f32 %v511, %v544
        %v553 = vmul.f32 %v513, %v545
        %v554 = vmul.f32 %v515, %v546
        %v555 = vmul.f32 %v519, %v547
        %v556 = vmul.f32 %v521, %v548
        %v557 = vmul.f32 %v523, %v549
        %v558 = vmul.f32 %v525, %v550
        %v559 = vmul.f32 %v551, 0.16666667
        %v560 = vmul.f32 %v552, 0.16666667
        %v561 = vmul.f32 %v553, 0.16666667
        %v562 = vmul.f32 %v554, 0.16666667
        %v563 = vmul.f32 %v555, 0.16666667
        %v564 = vmul.f32 %v556, 0.16666667
        %v565 = vmul.f32 %v557, 0.16666667
        %v566 = vmul.f32 %v558, 0.16666667
        %567 = vrot.lane.b32.xlu0 %v559, 17
        %v568 = vpop.permute.xlu0 %567
        %569 = vrot.lane.b32.xlu0 %v561, 17
        %v570 = vpop.permute.xlu0 %569
        %571 = vrot.lane.b32.xlu0 %v563, 17
        %v572 = vpop.permute.xlu0 %571
        %573 = vrot.lane.b32.xlu0 %v565, 17
        %v574 = vpop.permute.xlu0 %573
        %575 = vrot.lane.b32.xlu0 %v560, 17
        %v576 = vpop.permute.xlu0 %575
        %577 = vrot.lane.b32.xlu0 %v562, 17
        %v578 = vpop.permute.xlu0 %577
        %579 = vrot.lane.b32.xlu0 %v564, 17
        %v580 = vpop.permute.xlu0 %579
        %581 = vrot.lane.b32.xlu0 %v566, 17
        %v582 = vpop.permute.xlu0 %581
        %v583 = vlaneseq
        %v584 = vand.u32 %v583, 127
        %vm585 = vcmp.lt.s32.totalorder %v584, 17
        %v586 = vsel %vm585, %v568, %v576
        %v587 = vsel %vm585, %v570, %v578
        %v588 = vsel %vm585, %v572, %v580
        %v589 = vsel %vm585, %v574, %v582
        %v590 = vsel %vm585, %v576, %v568
        %v591 = vsel %vm585, %v578, %v570
        %v592 = vsel %vm585, %v580, %v572
        %v593 = vsel %vm585, %v582, %v574
        %v594 = vld [vmem:[%s1] ss:$8 sm:$0x3]
        %v596 = vlaneseq
        %v597 = vshrl.u32 %v596, 7
        %v598 = vsub.s32 0, %v597
        %v599 = vrot.slane %v594, %v598
        %v600 = vlaneseq
        %v601 = vshrl.u32 %v600, 7
        %v602 = vsub.s32 1, %v601
        %v603 = vrot.slane %v594, %v602
        %v606 = vmul.f32 %v590, %v599
        %v607 = vmul.f32 %v586, %v603
        %v608 = vmul.f32 %v591, %v599
        %v609 = vmul.f32 %v587, %v603
        %v610 = vmul.f32 %v592, %v599
        %v611 = vmul.f32 %v588, %v603
        %v612 = vmul.f32 %v593, %v599
        %v613 = vmul.f32 %v589, %v603
        %v614 = vld [vmem:[%s396] sm:$0xff]
        %v615 = vld [vmem:[%s396 + $0x8] sm:$0xff]
        %v616 = vld [vmem:[%s396 + $0x10] sm:$0xff]
        %v617 = vld [vmem:[%s396 + $0x18] sm:$0xff]
        %619 = vset.pattern.permute.xlu0 0
        %620 = vperm.xlu0 %619, %v614
        %v621 = vpop.permute.xlu0 %620
        %624 = vset.pattern.permute.xlu0 0
        %625 = vperm.xlu0 %624, %v615
        %v626 = vpop.permute.xlu0 %625
        %629 = vset.pattern.permute.xlu0 0
        %630 = vperm.xlu0 %629, %v616
        %v631 = vpop.permute.xlu0 %630
        %634 = vset.pattern.permute.xlu0 0
        %635 = vperm.xlu0 %634, %v617
        %v636 = vpop.permute.xlu0 %635
        %v638 = vmul.f32 %v606, %v621
        %v639 = vmul.f32 %v607, %v621
        %v640 = vmul.f32 %v608, %v626
        %v641 = vmul.f32 %v609, %v626
        %v642 = vmul.f32 %v610, %v631
        %v643 = vmul.f32 %v611, %v631
        %v644 = vmul.f32 %v612, %v636
        %v645 = vmul.f32 %v613, %v636
        %v646 = vadd.f32 %v638, 0.0
        %v647 = vadd.f32 %v639, 0.0
        %v648 = vadd.f32 %v640, 0.0
        %v649 = vadd.f32 %v641, 0.0
        %v650 = vadd.f32 %v642, 0.0
        %v651 = vadd.f32 %v643, 0.0
        %v652 = vadd.f32 %v644, 0.0
        %v653 = vadd.f32 %v645, 0.0
        %654 = vrot.lane.b32.xlu0 %v559, 16
        %v655 = vpop.permute.xlu0 %654
        %656 = vrot.lane.b32.xlu0 %v561, 16
        %v657 = vpop.permute.xlu0 %656
        %658 = vrot.lane.b32.xlu0 %v563, 16
        %v659 = vpop.permute.xlu0 %658
        %660 = vrot.lane.b32.xlu0 %v565, 16
        %v661 = vpop.permute.xlu0 %660
        %662 = vrot.lane.b32.xlu0 %v560, 16
        %v663 = vpop.permute.xlu0 %662
        %664 = vrot.lane.b32.xlu0 %v562, 16
        %v665 = vpop.permute.xlu0 %664
        %666 = vrot.lane.b32.xlu0 %v564, 16
        %v667 = vpop.permute.xlu0 %666
        %668 = vrot.lane.b32.xlu0 %v566, 16
        %v669 = vpop.permute.xlu0 %668
        %vm670 = vcmp.lt.s32.totalorder %v584, 16
        %v671 = vsel %vm670, %v655, %v663
        %v672 = vsel %vm670, %v657, %v665
        %v673 = vsel %vm670, %v659, %v667
        %v674 = vsel %vm670, %v661, %v669
        %v675 = vsel %vm670, %v663, %v655
        %v676 = vsel %vm670, %v665, %v657
        %v677 = vsel %vm670, %v667, %v659
        %v678 = vsel %vm670, %v669, %v661
        %s679 = scalar_lea.vmem %s1, 1
        %v680 = vld [vmem:[%s679] ss:$8 sm:$0x3]
        %v682 = vlaneseq
        %v683 = vshrl.u32 %v682, 7
        %v684 = vsub.s32 0, %v683
        %v685 = vrot.slane %v680, %v684
        %v686 = vlaneseq
        %v687 = vshrl.u32 %v686, 7
        %v688 = vsub.s32 1, %v687
        %v689 = vrot.slane %v680, %v688
        %v692 = vmul.f32 %v675, %v685
        %v693 = vmul.f32 %v671, %v689
        %v694 = vmul.f32 %v676, %v685
        %v695 = vmul.f32 %v672, %v689
        %v696 = vmul.f32 %v677, %v685
        %v697 = vmul.f32 %v673, %v689
        %v698 = vmul.f32 %v678, %v685
        %v699 = vmul.f32 %v674, %v689
        %700 = vset.pattern.permute.xlu0 1
        %701 = vperm.xlu0 %700, %v614
        %v702 = vpop.permute.xlu0 %701
        %704 = vset.pattern.permute.xlu0 1
        %705 = vperm.xlu0 %704, %v615
        %v706 = vpop.permute.xlu0 %705
        %708 = vset.pattern.permute.xlu0 1
        %709 = vperm.xlu0 %708, %v616
        %v710 = vpop.permute.xlu0 %709
        %712 = vset.pattern.permute.xlu0 1
        %713 = vperm.xlu0 %712, %v617
        %v714 = vpop.permute.xlu0 %713
        %v716 = vmul.f32 %v692, %v702
        %v717 = vmul.f32 %v693, %v702
        %v718 = vmul.f32 %v694, %v706
        %v719 = vmul.f32 %v695, %v706
        %v720 = vmul.f32 %v696, %v710
        %v721 = vmul.f32 %v697, %v710
        %v722 = vmul.f32 %v698, %v714
        %v723 = vmul.f32 %v699, %v714
        %v724 = vadd.f32 %v646, %v716
        %v725 = vadd.f32 %v647, %v717
        %v726 = vadd.f32 %v648, %v718
        %v727 = vadd.f32 %v649, %v719
        %v728 = vadd.f32 %v650, %v720
        %v729 = vadd.f32 %v651, %v721
        %v730 = vadd.f32 %v652, %v722
        %v731 = vadd.f32 %v653, %v723
        %732 = vrot.lane.b32.xlu0 %v559, 15
        %v733 = vpop.permute.xlu0 %732
        %734 = vrot.lane.b32.xlu0 %v561, 15
        %v735 = vpop.permute.xlu0 %734
        %736 = vrot.lane.b32.xlu0 %v563, 15
        %v737 = vpop.permute.xlu0 %736
        %738 = vrot.lane.b32.xlu0 %v565, 15
        %v739 = vpop.permute.xlu0 %738
        %740 = vrot.lane.b32.xlu0 %v560, 15
        %v741 = vpop.permute.xlu0 %740
        %742 = vrot.lane.b32.xlu0 %v562, 15
        %v743 = vpop.permute.xlu0 %742
        %744 = vrot.lane.b32.xlu0 %v564, 15
        %v745 = vpop.permute.xlu0 %744
        %746 = vrot.lane.b32.xlu0 %v566, 15
        %v747 = vpop.permute.xlu0 %746
        %vm748 = vcmp.lt.s32.totalorder %v584, 15
        %v749 = vsel %vm748, %v733, %v741
        %v750 = vsel %vm748, %v735, %v743
        %v751 = vsel %vm748, %v737, %v745
        %v752 = vsel %vm748, %v739, %v747
        %v753 = vsel %vm748, %v741, %v733
        %v754 = vsel %vm748, %v743, %v735
        %v755 = vsel %vm748, %v745, %v737
        %v756 = vsel %vm748, %v747, %v739
        %s757 = scalar_lea.vmem %s1, 2
        %v758 = vld [vmem:[%s757] ss:$8 sm:$0x3]
        %v760 = vlaneseq
        %v761 = vshrl.u32 %v760, 7
        %v762 = vsub.s32 0, %v761
        %v763 = vrot.slane %v758, %v762
        %v764 = vlaneseq
        %v765 = vshrl.u32 %v764, 7
        %v766 = vsub.s32 1, %v765
        %v767 = vrot.slane %v758, %v766
        %v770 = vmul.f32 %v753, %v763
        %v771 = vmul.f32 %v749, %v767
        %v772 = vmul.f32 %v754, %v763
        %v773 = vmul.f32 %v750, %v767
        %v774 = vmul.f32 %v755, %v763
        %v775 = vmul.f32 %v751, %v767
        %v776 = vmul.f32 %v756, %v763
        %v777 = vmul.f32 %v752, %v767
        %778 = vset.pattern.permute.xlu0 2
        %779 = vperm.xlu0 %778, %v614
        %v780 = vpop.permute.xlu0 %779
        %782 = vset.pattern.permute.xlu0 2
        %783 = vperm.xlu0 %782, %v615
        %v784 = vpop.permute.xlu0 %783
        %786 = vset.pattern.permute.xlu0 2
        %787 = vperm.xlu0 %786, %v616
        %v788 = vpop.permute.xlu0 %787
        %790 = vset.pattern.permute.xlu0 2
        %791 = vperm.xlu0 %790, %v617
        %v792 = vpop.permute.xlu0 %791
        %v794 = vmul.f32 %v770, %v780
        %v795 = vmul.f32 %v771, %v780
        %v796 = vmul.f32 %v772, %v784
        %v797 = vmul.f32 %v773, %v784
        %v798 = vmul.f32 %v774, %v788
        %v799 = vmul.f32 %v775, %v788
        %v800 = vmul.f32 %v776, %v792
        %v801 = vmul.f32 %v777, %v792
        %v802 = vadd.f32 %v724, %v794
        %v803 = vadd.f32 %v725, %v795
        %v804 = vadd.f32 %v726, %v796
        %v805 = vadd.f32 %v727, %v797
        %v806 = vadd.f32 %v728, %v798
        %v807 = vadd.f32 %v729, %v799
        %v808 = vadd.f32 %v730, %v800
        %v809 = vadd.f32 %v731, %v801
        %810 = vrot.lane.b32.xlu0 %v559, 1
        %v811 = vpop.permute.xlu0 %810
        %812 = vrot.lane.b32.xlu0 %v561, 1
        %v813 = vpop.permute.xlu0 %812
        %814 = vrot.lane.b32.xlu0 %v563, 1
        %v815 = vpop.permute.xlu0 %814
        %816 = vrot.lane.b32.xlu0 %v565, 1
        %v817 = vpop.permute.xlu0 %816
        %818 = vrot.lane.b32.xlu0 %v560, 1
        %v819 = vpop.permute.xlu0 %818
        %820 = vrot.lane.b32.xlu0 %v562, 1
        %v821 = vpop.permute.xlu0 %820
        %822 = vrot.lane.b32.xlu0 %v564, 1
        %v823 = vpop.permute.xlu0 %822
        %824 = vrot.lane.b32.xlu0 %v566, 1
        %v825 = vpop.permute.xlu0 %824
        %vm826 = vcmp.lt.s32.totalorder %v584, 1
        %v827 = vsel %vm826, %v811, %v819
        %v828 = vsel %vm826, %v813, %v821
        %v829 = vsel %vm826, %v815, %v823
        %v830 = vsel %vm826, %v817, %v825
        %v831 = vsel %vm826, %v819, %v811
        %v832 = vsel %vm826, %v821, %v813
        %v833 = vsel %vm826, %v823, %v815
        %v834 = vsel %vm826, %v825, %v817
        %s835 = scalar_lea.vmem %s1, 3
        %v836 = vld [vmem:[%s835] ss:$8 sm:$0x3]
        %v838 = vlaneseq
        %v839 = vshrl.u32 %v838, 7
        %v840 = vsub.s32 0, %v839
        %v841 = vrot.slane %v836, %v840
        %v842 = vlaneseq
        %v843 = vshrl.u32 %v842, 7
        %v844 = vsub.s32 1, %v843
        %v845 = vrot.slane %v836, %v844
        %v848 = vmul.f32 %v831, %v841
        %v849 = vmul.f32 %v827, %v845
        %v850 = vmul.f32 %v832, %v841
        %v851 = vmul.f32 %v828, %v845
        %v852 = vmul.f32 %v833, %v841
        %v853 = vmul.f32 %v829, %v845
        %v854 = vmul.f32 %v834, %v841
        %v855 = vmul.f32 %v830, %v845
        %856 = vset.pattern.permute.xlu0 3
        %857 = vperm.xlu0 %856, %v614
        %v858 = vpop.permute.xlu0 %857
        %860 = vset.pattern.permute.xlu0 3
        %861 = vperm.xlu0 %860, %v615
        %v862 = vpop.permute.xlu0 %861
        %864 = vset.pattern.permute.xlu0 3
        %865 = vperm.xlu0 %864, %v616
        %v866 = vpop.permute.xlu0 %865
        %868 = vset.pattern.permute.xlu0 3
        %869 = vperm.xlu0 %868, %v617
        %v870 = vpop.permute.xlu0 %869
        %v872 = vmul.f32 %v848, %v858
        %v873 = vmul.f32 %v849, %v858
        %v874 = vmul.f32 %v850, %v862
        %v875 = vmul.f32 %v851, %v862
        %v876 = vmul.f32 %v852, %v866
        %v877 = vmul.f32 %v853, %v866
        %v878 = vmul.f32 %v854, %v870
        %v879 = vmul.f32 %v855, %v870
        %v880 = vadd.f32 %v802, %v872
        %v881 = vadd.f32 %v803, %v873
        %v882 = vadd.f32 %v804, %v874
        %v883 = vadd.f32 %v805, %v875
        %v884 = vadd.f32 %v806, %v876
        %v885 = vadd.f32 %v807, %v877
        %v886 = vadd.f32 %v808, %v878
        %v887 = vadd.f32 %v809, %v879
        %888 = vset.pattern.permute.xlu0 4
        %889 = vperm.xlu0 %888, %v614
        %v890 = vpop.permute.xlu0 %889
        %892 = vset.pattern.permute.xlu0 4
        %893 = vperm.xlu0 %892, %v615
        %v894 = vpop.permute.xlu0 %893
        %896 = vset.pattern.permute.xlu0 4
        %897 = vperm.xlu0 %896, %v616
        %v898 = vpop.permute.xlu0 %897
        %900 = vset.pattern.permute.xlu0 4
        %901 = vperm.xlu0 %900, %v617
        %v902 = vpop.permute.xlu0 %901
        %v904 = vmul.f32 %v559, %v890
        %v905 = vmul.f32 %v560, %v890
        %v906 = vmul.f32 %v561, %v894
        %v907 = vmul.f32 %v562, %v894
        %v908 = vmul.f32 %v563, %v898
        %v909 = vmul.f32 %v564, %v898
        %v910 = vmul.f32 %v565, %v902
        %v911 = vmul.f32 %v566, %v902
        %v912 = vadd.f32 %v880, %v904
        %v913 = vadd.f32 %v881, %v905
        %v914 = vadd.f32 %v882, %v906
        %v915 = vadd.f32 %v883, %v907
        %v916 = vadd.f32 %v884, %v908
        %v917 = vadd.f32 %v885, %v909
        %v918 = vadd.f32 %v886, %v910
        %v919 = vadd.f32 %v887, %v911
        %920 = vrot.lane.b32.xlu0 %v559, 127
        %v921 = vpop.permute.xlu0 %920
        %922 = vrot.lane.b32.xlu0 %v561, 127
        %v923 = vpop.permute.xlu0 %922
        %924 = vrot.lane.b32.xlu0 %v563, 127
        %v925 = vpop.permute.xlu0 %924
        %926 = vrot.lane.b32.xlu0 %v565, 127
        %v927 = vpop.permute.xlu0 %926
        %928 = vrot.lane.b32.xlu0 %v560, 127
        %v929 = vpop.permute.xlu0 %928
        %930 = vrot.lane.b32.xlu0 %v562, 127
        %v931 = vpop.permute.xlu0 %930
        %932 = vrot.lane.b32.xlu0 %v564, 127
        %v933 = vpop.permute.xlu0 %932
        %934 = vrot.lane.b32.xlu0 %v566, 127
        %v935 = vpop.permute.xlu0 %934
        %vm936 = vcmp.lt.s32.totalorder %v584, 127
        %v937 = vsel %vm936, %v921, %v929
        %v938 = vsel %vm936, %v923, %v931
        %v939 = vsel %vm936, %v925, %v933
        %v940 = vsel %vm936, %v927, %v935
        %v941 = vsel %vm936, %v929, %v921
        %v942 = vsel %vm936, %v931, %v923
        %v943 = vsel %vm936, %v933, %v925
        %v944 = vsel %vm936, %v935, %v927
        %s945 = scalar_lea.vmem %s1, 5
        %v946 = vld [vmem:[%s945] ss:$8 sm:$0x3]
        %v948 = vlaneseq
        %v949 = vshrl.u32 %v948, 7
        %v950 = vsub.s32 0, %v949
        %v951 = vrot.slane %v946, %v950
        %v952 = vlaneseq
        %v953 = vshrl.u32 %v952, 7
        %v954 = vsub.s32 1, %v953
        %v955 = vrot.slane %v946, %v954
        %v958 = vmul.f32 %v937, %v951
        %v959 = vmul.f32 %v941, %v955
        %v960 = vmul.f32 %v938, %v951
        %v961 = vmul.f32 %v942, %v955
        %v962 = vmul.f32 %v939, %v951
        %v963 = vmul.f32 %v943, %v955
        %v964 = vmul.f32 %v940, %v951
        %v965 = vmul.f32 %v944, %v955
        %966 = vset.pattern.permute.xlu0 5
        %967 = vperm.xlu0 %966, %v614
        %v968 = vpop.permute.xlu0 %967
        %970 = vset.pattern.permute.xlu0 5
        %971 = vperm.xlu0 %970, %v615
        %v972 = vpop.permute.xlu0 %971
        %974 = vset.pattern.permute.xlu0 5
        %975 = vperm.xlu0 %974, %v616
        %v976 = vpop.permute.xlu0 %975
        %978 = vset.pattern.permute.xlu0 5
        %979 = vperm.xlu0 %978, %v617
        %v980 = vpop.permute.xlu0 %979
        %v982 = vmul.f32 %v958, %v968
        %v983 = vmul.f32 %v959, %v968
        %v984 = vmul.f32 %v960, %v972
        %v985 = vmul.f32 %v961, %v972
        %v986 = vmul.f32 %v962, %v976
        %v987 = vmul.f32 %v963, %v976
        %v988 = vmul.f32 %v964, %v980
        %v989 = vmul.f32 %v965, %v980
        %v990 = vadd.f32 %v912, %v982
        %v991 = vadd.f32 %v913, %v983
        %v992 = vadd.f32 %v914, %v984
        %v993 = vadd.f32 %v915, %v985
        %v994 = vadd.f32 %v916, %v986
        %v995 = vadd.f32 %v917, %v987
        %v996 = vadd.f32 %v918, %v988
        %v997 = vadd.f32 %v919, %v989
        %998 = vrot.lane.b32.xlu0 %v559, 113
        %v999 = vpop.permute.xlu0 %998
        %1000 = vrot.lane.b32.xlu0 %v561, 113
        %v1001 = vpop.permute.xlu0 %1000
        %1002 = vrot.lane.b32.xlu0 %v563, 113
        %v1003 = vpop.permute.xlu0 %1002
        %1004 = vrot.lane.b32.xlu0 %v565, 113
        %v1005 = vpop.permute.xlu0 %1004
        %1006 = vrot.lane.b32.xlu0 %v560, 113
        %v1007 = vpop.permute.xlu0 %1006
        %1008 = vrot.lane.b32.xlu0 %v562, 113
        %v1009 = vpop.permute.xlu0 %1008
        %1010 = vrot.lane.b32.xlu0 %v564, 113
        %v1011 = vpop.permute.xlu0 %1010
        %1012 = vrot.lane.b32.xlu0 %v566, 113
        %v1013 = vpop.permute.xlu0 %1012
        %vm1014 = vcmp.lt.s32.totalorder %v584, 113
        %v1015 = vsel %vm1014, %v999, %v1007
        %v1016 = vsel %vm1014, %v1001, %v1009
        %v1017 = vsel %vm1014, %v1003, %v1011
        %v1018 = vsel %vm1014, %v1005, %v1013
        %v1019 = vsel %vm1014, %v1007, %v999
        %v1020 = vsel %vm1014, %v1009, %v1001
        %v1021 = vsel %vm1014, %v1011, %v1003
        %v1022 = vsel %vm1014, %v1013, %v1005
        %s1023 = scalar_lea.vmem %s1, 6
        %v1024 = vld [vmem:[%s1023] ss:$8 sm:$0x3]
        %v1026 = vlaneseq
        %v1027 = vshrl.u32 %v1026, 7
        %v1028 = vsub.s32 0, %v1027
        %v1029 = vrot.slane %v1024, %v1028
        %v1030 = vlaneseq
        %v1031 = vshrl.u32 %v1030, 7
        %v1032 = vsub.s32 1, %v1031
        %v1033 = vrot.slane %v1024, %v1032
        %v1036 = vmul.f32 %v1015, %v1029
        %v1037 = vmul.f32 %v1019, %v1033
        %v1038 = vmul.f32 %v1016, %v1029
        %v1039 = vmul.f32 %v1020, %v1033
        %v1040 = vmul.f32 %v1017, %v1029
        %v1041 = vmul.f32 %v1021, %v1033
        %v1042 = vmul.f32 %v1018, %v1029
        %v1043 = vmul.f32 %v1022, %v1033
        %1044 = vset.pattern.permute.xlu0 6
        %1045 = vperm.xlu0 %1044, %v614
        %v1046 = vpop.permute.xlu0 %1045
        %1048 = vset.pattern.permute.xlu0 6
        %1049 = vperm.xlu0 %1048, %v615
        %v1050 = vpop.permute.xlu0 %1049
        %1052 = vset.pattern.permute.xlu0 6
        %1053 = vperm.xlu0 %1052, %v616
        %v1054 = vpop.permute.xlu0 %1053
        %1056 = vset.pattern.permute.xlu0 6
        %1057 = vperm.xlu0 %1056, %v617
        %v1058 = vpop.permute.xlu0 %1057
        %v1060 = vmul.f32 %v1036, %v1046
        %v1061 = vmul.f32 %v1037, %v1046
        %v1062 = vmul.f32 %v1038, %v1050
        %v1063 = vmul.f32 %v1039, %v1050
        %v1064 = vmul.f32 %v1040, %v1054
        %v1065 = vmul.f32 %v1041, %v1054
        %v1066 = vmul.f32 %v1042, %v1058
        %v1067 = vmul.f32 %v1043, %v1058
        %v1068 = vadd.f32 %v990, %v1060
        %v1069 = vadd.f32 %v991, %v1061
        %v1070 = vadd.f32 %v992, %v1062
        %v1071 = vadd.f32 %v993, %v1063
        %v1072 = vadd.f32 %v994, %v1064
        %v1073 = vadd.f32 %v995, %v1065
        %v1074 = vadd.f32 %v996, %v1066
        %v1075 = vadd.f32 %v997, %v1067
        %1076 = vrot.lane.b32.xlu0 %v559, 112
        %v1077 = vpop.permute.xlu0 %1076
        %1078 = vrot.lane.b32.xlu0 %v561, 112
        %v1079 = vpop.permute.xlu0 %1078
        %1080 = vrot.lane.b32.xlu0 %v563, 112
        %v1081 = vpop.permute.xlu0 %1080
        %1082 = vrot.lane.b32.xlu0 %v565, 112
        %v1083 = vpop.permute.xlu0 %1082
        %1084 = vrot.lane.b32.xlu0 %v560, 112
        %v1085 = vpop.permute.xlu0 %1084
        %1086 = vrot.lane.b32.xlu0 %v562, 112
        %v1087 = vpop.permute.xlu0 %1086
        %1088 = vrot.lane.b32.xlu0 %v564, 112
        %v1089 = vpop.permute.xlu0 %1088
        %1090 = vrot.lane.b32.xlu0 %v566, 112
        %v1091 = vpop.permute.xlu0 %1090
        %vm1092 = vcmp.lt.s32.totalorder %v584, 112
        %v1093 = vsel %vm1092, %v1077, %v1085
        %v1094 = vsel %vm1092, %v1079, %v1087
        %v1095 = vsel %vm1092, %v1081, %v1089
        %v1096 = vsel %vm1092, %v1083, %v1091
        %v1097 = vsel %vm1092, %v1085, %v1077
        %v1098 = vsel %vm1092, %v1087, %v1079
        %v1099 = vsel %vm1092, %v1089, %v1081
        %v1100 = vsel %vm1092, %v1091, %v1083
        %s1101 = scalar_lea.vmem %s1, 7
        %v1102 = vld [vmem:[%s1101] ss:$8 sm:$0x3]
        %v1104 = vlaneseq
        %v1105 = vshrl.u32 %v1104, 7
        %v1106 = vsub.s32 0, %v1105
        %v1107 = vrot.slane %v1102, %v1106
        %v1108 = vlaneseq
        %v1109 = vshrl.u32 %v1108, 7
        %v1110 = vsub.s32 1, %v1109
        %v1111 = vrot.slane %v1102, %v1110
        %v1114 = vmul.f32 %v1093, %v1107
        %v1115 = vmul.f32 %v1097, %v1111
        %v1116 = vmul.f32 %v1094, %v1107
        %v1117 = vmul.f32 %v1098, %v1111
        %v1118 = vmul.f32 %v1095, %v1107
        %v1119 = vmul.f32 %v1099, %v1111
        %v1120 = vmul.f32 %v1096, %v1107
        %v1121 = vmul.f32 %v1100, %v1111
        %1122 = vset.pattern.permute.xlu0 7
        %1123 = vperm.xlu0 %1122, %v614
        %v1124 = vpop.permute.xlu0 %1123
        %1126 = vset.pattern.permute.xlu0 7
        %1127 = vperm.xlu0 %1126, %v615
        %v1128 = vpop.permute.xlu0 %1127
        %1130 = vset.pattern.permute.xlu0 7
        %1131 = vperm.xlu0 %1130, %v616
        %v1132 = vpop.permute.xlu0 %1131
        %1134 = vset.pattern.permute.xlu0 7
        %1135 = vperm.xlu0 %1134, %v617
        %v1136 = vpop.permute.xlu0 %1135
        %v1138 = vmul.f32 %v1114, %v1124
        %v1139 = vmul.f32 %v1115, %v1124
        %v1140 = vmul.f32 %v1116, %v1128
        %v1141 = vmul.f32 %v1117, %v1128
        %v1142 = vmul.f32 %v1118, %v1132
        %v1143 = vmul.f32 %v1119, %v1132
        %v1144 = vmul.f32 %v1120, %v1136
        %v1145 = vmul.f32 %v1121, %v1136
        %v1146 = vadd.f32 %v1068, %v1138
        %v1147 = vadd.f32 %v1069, %v1139
        %v1148 = vadd.f32 %v1070, %v1140
        %v1149 = vadd.f32 %v1071, %v1141
        %v1150 = vadd.f32 %v1072, %v1142
        %v1151 = vadd.f32 %v1073, %v1143
        %v1152 = vadd.f32 %v1074, %v1144
        %v1153 = vadd.f32 %v1075, %v1145
        %1154 = vrot.lane.b32.xlu0 %v559, 111
        %v1155 = vpop.permute.xlu0 %1154
        %1156 = vrot.lane.b32.xlu0 %v561, 111
        %v1157 = vpop.permute.xlu0 %1156
        %1158 = vrot.lane.b32.xlu0 %v563, 111
        %v1159 = vpop.permute.xlu0 %1158
        %1160 = vrot.lane.b32.xlu0 %v565, 111
        %v1161 = vpop.permute.xlu0 %1160
        %1162 = vrot.lane.b32.xlu0 %v560, 111
        %v1163 = vpop.permute.xlu0 %1162
        %1164 = vrot.lane.b32.xlu0 %v562, 111
        %v1165 = vpop.permute.xlu0 %1164
        %1166 = vrot.lane.b32.xlu0 %v564, 111
        %v1167 = vpop.permute.xlu0 %1166
        %1168 = vrot.lane.b32.xlu0 %v566, 111
        %v1169 = vpop.permute.xlu0 %1168
        %vm1170 = vcmp.lt.s32.totalorder %v584, 111
        %v1171 = vsel %vm1170, %v1155, %v1163
        %v1172 = vsel %vm1170, %v1157, %v1165
        %v1173 = vsel %vm1170, %v1159, %v1167
        %v1174 = vsel %vm1170, %v1161, %v1169
        %v1175 = vsel %vm1170, %v1163, %v1155
        %v1176 = vsel %vm1170, %v1165, %v1157
        %v1177 = vsel %vm1170, %v1167, %v1159
        %v1178 = vsel %vm1170, %v1169, %v1161
        %s1179 = scalar_lea.vmem %s1, 16
        %v1180 = vld [vmem:[%s1179] ss:$8 sm:$0x3]
        %v1182 = vlaneseq
        %v1183 = vshrl.u32 %v1182, 7
        %v1184 = vsub.s32 0, %v1183
        %v1185 = vrot.slane %v1180, %v1184
        %v1186 = vlaneseq
        %v1187 = vshrl.u32 %v1186, 7
        %v1188 = vsub.s32 1, %v1187
        %v1189 = vrot.slane %v1180, %v1188
        %v1192 = vmul.f32 %v1171, %v1185
        %v1193 = vmul.f32 %v1175, %v1189
        %v1194 = vmul.f32 %v1172, %v1185
        %v1195 = vmul.f32 %v1176, %v1189
        %v1196 = vmul.f32 %v1173, %v1185
        %v1197 = vmul.f32 %v1177, %v1189
        %v1198 = vmul.f32 %v1174, %v1185
        %v1199 = vmul.f32 %v1178, %v1189
        %1200 = vset.pattern.permute.xlu0 8
        %1201 = vperm.xlu0 %1200, %v614
        %v1202 = vpop.permute.xlu0 %1201
        %1204 = vset.pattern.permute.xlu0 8
        %1205 = vperm.xlu0 %1204, %v615
        %v1206 = vpop.permute.xlu0 %1205
        %1208 = vset.pattern.permute.xlu0 8
        %1209 = vperm.xlu0 %1208, %v616
        %v1210 = vpop.permute.xlu0 %1209
        %1212 = vset.pattern.permute.xlu0 8
        %1213 = vperm.xlu0 %1212, %v617
        %v1214 = vpop.permute.xlu0 %1213
        %v1216 = vmul.f32 %v1192, %v1202
        %v1217 = vmul.f32 %v1193, %v1202
        %v1218 = vmul.f32 %v1194, %v1206
        %v1219 = vmul.f32 %v1195, %v1206
        %v1220 = vmul.f32 %v1196, %v1210
        %v1221 = vmul.f32 %v1197, %v1210
        %v1222 = vmul.f32 %v1198, %v1214
        %v1223 = vmul.f32 %v1199, %v1214
        %v1224 = vadd.f32 %v1146, %v1216
        %v1225 = vadd.f32 %v1147, %v1217
        %v1226 = vadd.f32 %v1148, %v1218
        %v1227 = vadd.f32 %v1149, %v1219
        %v1228 = vadd.f32 %v1150, %v1220
        %v1229 = vadd.f32 %v1151, %v1221
        %v1230 = vadd.f32 %v1152, %v1222
        %v1231 = vadd.f32 %v1153, %v1223
        %v1232 = vld [vmem:[%s402] sm:$0xff]
        %v1233 = vld [vmem:[%s402 + $0x8] sm:$0xff]
        %v1234 = vld [vmem:[%s402 + $0x10] sm:$0xff]
        %v1235 = vld [vmem:[%s402 + $0x18] sm:$0xff]
        %1237 = vset.pattern.permute.xlu0 0
        %1238 = vperm.xlu0 %1237, %v1232
        %v1239 = vpop.permute.xlu0 %1238
        %1242 = vset.pattern.permute.xlu0 0
        %1243 = vperm.xlu0 %1242, %v1233
        %v1244 = vpop.permute.xlu0 %1243
        %1247 = vset.pattern.permute.xlu0 0
        %1248 = vperm.xlu0 %1247, %v1234
        %v1249 = vpop.permute.xlu0 %1248
        %1252 = vset.pattern.permute.xlu0 0
        %1253 = vperm.xlu0 %1252, %v1235
        %v1254 = vpop.permute.xlu0 %1253
        %v1256 = vadd.f32 %v1224, %v1239
        %v1257 = vadd.f32 %v1225, %v1239
        %v1258 = vadd.f32 %v1226, %v1244
        %v1259 = vadd.f32 %v1227, %v1244
        %v1260 = vadd.f32 %v1228, %v1249
        %v1261 = vadd.f32 %v1229, %v1249
        %v1262 = vadd.f32 %v1230, %v1254
        %v1263 = vadd.f32 %v1231, %v1254
        %v1264 = vadd.f32 %v1256, 3.0
        %v1265 = vadd.f32 %v1257, 3.0
        %v1266 = vadd.f32 %v1258, 3.0
        %v1267 = vadd.f32 %v1259, 3.0
        %v1268 = vadd.f32 %v1260, 3.0
        %v1269 = vadd.f32 %v1261, 3.0
        %v1270 = vadd.f32 %v1262, 3.0
        %v1271 = vadd.f32 %v1263, 3.0
        %v1272 = vmax.f32 %v1264, 0.0
        %v1273 = vmax.f32 %v1265, 0.0
        %v1274 = vmax.f32 %v1266, 0.0
        %v1275 = vmax.f32 %v1267, 0.0
        %v1276 = vmax.f32 %v1268, 0.0
        %v1277 = vmax.f32 %v1269, 0.0
        %v1278 = vmax.f32 %v1270, 0.0
        %v1279 = vmax.f32 %v1271, 0.0
        %v1280 = vmin.f32 %v1272, 6.0
        %v1281 = vmin.f32 %v1273, 6.0
        %v1282 = vmin.f32 %v1274, 6.0
        %v1283 = vmin.f32 %v1275, 6.0
        %v1284 = vmin.f32 %v1276, 6.0
        %v1285 = vmin.f32 %v1277, 6.0
        %v1286 = vmin.f32 %v1278, 6.0
        %v1287 = vmin.f32 %v1279, 6.0
        %v1288 = vmul.f32 %v1256, %v1280
        %v1289 = vmul.f32 %v1257, %v1281
        %v1290 = vmul.f32 %v1258, %v1282
        %v1291 = vmul.f32 %v1259, %v1283
        %v1292 = vmul.f32 %v1260, %v1284
        %v1293 = vmul.f32 %v1261, %v1285
        %v1294 = vmul.f32 %v1262, %v1286
        %v1295 = vmul.f32 %v1263, %v1287
        %v1296 = vmul.f32 %v1288, 0.16666667
        %v1297 = vmul.f32 %v1289, 0.16666667
        %v1298 = vmul.f32 %v1290, 0.16666667
        %v1299 = vmul.f32 %v1291, 0.16666667
        %v1300 = vmul.f32 %v1292, 0.16666667
        %v1301 = vmul.f32 %v1293, 0.16666667
        %v1302 = vmul.f32 %v1294, 0.16666667
        %v1303 = vmul.f32 %v1295, 0.16666667
        %s1304 = smul.u32 %s27, 32
        %v1305 = vpack.c.bf16 %v1298, %v1296
        %v1306 = vpack.c.bf16 %v1299, %v1297
        %v1307 = vpack.c.bf16 %v1302, %v1300
        %v1308 = vpack.c.bf16 %v1303, %v1301
        %s1309 = sshra.s32 %s1304, 4
        %s1310 = sand.u32 %s1304, 15
        %s1311 = smul.u32 %s1309, 2
        %s1312 = smul.addr %s1311, 8
        %s1313 = scalar_lea.vmem [#allocation2], %s1312
        %1314 = vst [vmem:[%s1313] sm:$0xff] %v1305
        %1315 = vst [vmem:[%s1313 + $0x8] sm:$0xff] %v1306
        %1316 = vst [vmem:[%s1313 + $0x10] sm:$0xff] %v1307
        %1317 = vst [vmem:[%s1313 + $0x18] sm:$0xff] %v1308
        %p1318 = scmp.eq.s32.totalorder %s27, 3
        // Predicated region
        $region53: #{tpu_custom_call.1} parent=51 // pred_check
          %p1319 = pneg %p1318
        $region54: #{tpu_custom_call.1} parent=51 // pred_check_branch
          %1321 = sbr.rel (%p1319) target = $region56
        $region55: #{tpu_custom_call.1} parent=51 // pred_region
          %v1322 = vld [vmem:[%s6] sm:$0xf]
          %v1323 = vld [vmem:[%s6 + $0x4] sm:$0xf]
          %v1324 = vld [vmem:[%s6 + $0x8] sm:$0xf]
          %v1325 = vld [vmem:[%s6 + $0xc] sm:$0xf]
          %v1326 = vld [vmem:[#allocation2] sm:$0xff]
          %v1327 = vld [vmem:[#allocation2 + $0x8] sm:$0xff]
          %v1328 = vld [vmem:[#allocation2 + $0x10] sm:$0xff]
          %v1329 = vld [vmem:[#allocation2 + $0x18] sm:$0xff]
          %v1330 = vld [vmem:[#allocation2 + $0x20] sm:$0xff]
          %v1331 = vld [vmem:[#allocation2 + $0x28] sm:$0xff]
          %v1332 = vld [vmem:[#allocation2 + $0x30] sm:$0xff]
          %v1333 = vld [vmem:[#allocation2 + $0x38] sm:$0xff]
          %v1334 = vld [vmem:[#allocation2 + $0x40] sm:$0xff]
          %v1335 = vld [vmem:[#allocation2 + $0x48] sm:$0xff]
          %v1336 = vld [vmem:[#allocation2 + $0x50] sm:$0xff]
          %v1337 = vld [vmem:[#allocation2 + $0x58] sm:$0xff]
          %v1338 = vld [vmem:[#allocation2 + $0x60] sm:$0xff]
          %v1339 = vld [vmem:[#allocation2 + $0x68] sm:$0xff]
          %v1340 = vld [vmem:[#allocation2 + $0x70] sm:$0xff]
          %v1341 = vld [vmem:[#allocation2 + $0x78] sm:$0xff]
          %v1342 = vld [vmem:[%s7] sm:$0xff]
          %v1343 = vld [vmem:[%s7 + $0x8] sm:$0xff]
          %v1344 = vld [vmem:[%s7 + $0x10] sm:$0xff]
          %v1345 = vld [vmem:[%s7 + $0x18] sm:$0xff]
          %1347 = vset.pattern.permute.xlu0 0
          %1348 = vperm.xlu0 %1347, %v1342
          %v1349 = vpop.permute.xlu0 %1348
          %1352 = vset.pattern.permute.xlu0 0
          %1353 = vperm.xlu0 %1352, %v1343
          %v1354 = vpop.permute.xlu0 %1353
          %1357 = vset.pattern.permute.xlu0 0
          %1358 = vperm.xlu0 %1357, %v1344
          %v1359 = vpop.permute.xlu0 %1358
          %1362 = vset.pattern.permute.xlu0 0
          %1363 = vperm.xlu0 %1362, %v1345
          %v1364 = vpop.permute.xlu0 %1363
          %v1370 = vunpack.c.l.b16 %v1322
          %v1371 = vunpack.c.l.b16 %v1323
          %v1372 = vunpack.c.l.b16 %v1324
          %v1373 = vunpack.c.l.b16 %v1325
          %v1374 = vpack.c.b16 %v1371, %v1370
          %v1375 = vpack.c.b16 %v1373, %v1372
          %1378 = vmatprep.subr.bf16.mxu0 %v1327
          %1379 = vmatpush1.bf16.msra.mxu0 %v1326
          %1380 = vmatprep.subr.bf16.mxu0 %v1329
          %1381 = vmatpush1.bf16.msra.mxu0 %v1328
          %1382 = vmatprep.subr.bf16.mxu0 %v1331
          %1383 = vmatpush1.bf16.msra.mxu0 %v1330
          %1384 = vmatprep.subr.bf16.mxu0 %v1333
          %1385 = vmatpush1.bf16.msra.mxu0 %v1332
          %1386 = vmatprep.subr.bf16.mxu0 %v1335
          %1387 = vmatpush1.bf16.msra.mxu0 %v1334
          %1388 = vmatprep.subr.bf16.mxu0 %v1337
          %1389 = vmatpush1.bf16.msra.mxu0 %v1336
          %1390 = vmatprep.subr.bf16.mxu0 %v1339
          %1391 = vmatpush1.bf16.msra.mxu0 %v1338
          %1392 = vmatprep.subr.bf16.mxu0 %v1341
          %1393 = vmatpush1.bf16.msra.mxu0 %v1340
          %1394 = vmatprep.subr.bf16.mxu0 0
          %1395 = vmatpush1.bf16.msra.mxu0 0
          %1396 = vmatprep.subr.bf16.mxu0 0
          %1397 = vmatpush1.bf16.msra.mxu0 0
          %1398 = vmatprep.subr.bf16.mxu0 0
          %1399 = vmatpush1.bf16.msra.mxu0 0
          %1400 = vmatprep.subr.bf16.mxu0 0
          %1401 = vmatpush1.bf16.msra.mxu0 0
          %1402 = vmatprep.subr.bf16.mxu0 0
          %1403 = vmatpush1.bf16.msra.mxu0 0
          %1404 = vmatprep.subr.bf16.mxu0 0
          %1405 = vmatpush1.bf16.msra.mxu0 0
          %1406 = vmatprep.subr.bf16.mxu0 0
          %1407 = vmatpush1.bf16.msra.mxu0 0
          %1408 = vmatprep.subr.bf16.mxu0 0
          %1409 = vmatpush1.bf16.msra.mxu0 0
          %1410 = vmatprep.mubr.bf16.mxu0 0
          %1411 = vmatmul.mubr.bf16.gmra.mrb[0].mxu0 %v1374
          %v1412 = vpop.f32.mrb[0].mxu0
          %v1413 = vadd.f32 %v1349, %v1412
          %v1414 = vpop.f32.mrb[0].mxu0
          %v1415 = vadd.f32 %v1349, %v1414
          %v1416 = vpop.f32.mrb[0].mxu0
          %v1417 = vadd.f32 %v1354, %v1416
          %v1418 = vpop.f32.mrb[0].mxu0
          %v1419 = vadd.f32 %v1354, %v1418
          %1420 = vmatprep.mubr.bf16.mxu0 0
          %1421 = vmatmul.mubr.bf16.gmra.mrb[0].mxu0 %v1375
          %v1422 = vpop.f32.mrb[0].mxu0
          %v1423 = vadd.f32 %v1359, %v1422
          %v1424 = vpop.f32.mrb[0].mxu0
          %v1425 = vadd.f32 %v1359, %v1424
          %v1426 = vpop.f32.mrb[0].mxu0
          %v1427 = vadd.f32 %v1364, %v1426
          %v1428 = vpop.f32.mrb[0].mxu0
          %v1429 = vadd.f32 %v1364, %v1428
          %1430 = vdwg.mxu0
          %v1431 = vunpack.c.l.bf16 %v405
          %v1432 = vunpack.c.h.bf16 %v405
          %v1433 = vunpack.c.l.bf16 %v406
          %v1434 = vunpack.c.h.bf16 %v406
          %v1435 = vunpack.c.l.bf16 %v407
          %v1436 = vunpack.c.h.bf16 %v407
          %v1437 = vunpack.c.l.bf16 %v408
          %v1438 = vunpack.c.h.bf16 %v408
          %v1439 = vadd.f32 %v1413, %v1431
          %v1440 = vadd.f32 %v1415, %v1432
          %v1441 = vadd.f32 %v1417, %v1433
          %v1442 = vadd.f32 %v1419, %v1434
          %v1443 = vadd.f32 %v1423, %v1435
          %v1444 = vadd.f32 %v1425, %v1436
          %v1445 = vadd.f32 %v1427, %v1437
          %v1446 = vadd.f32 %v1429, %v1438
          %v1447 = vpack.c.bf16 %v1441, %v1439
          %v1448 = vpack.c.bf16 %v1442, %v1440
          %v1449 = vpack.c.bf16 %v1445, %v1443
          %v1450 = vpack.c.bf16 %v1446, %v1444
          %v1455 = vunpack.c.l.b16 %v1447
          %v1456 = vunpack.c.l.b16 %v1448
          %v1457 = vunpack.c.h.b16 %v1447
          %v1458 = vunpack.c.h.b16 %v1448
          %v1459 = vunpack.c.l.b16 %v1449
          %v1460 = vunpack.c.l.b16 %v1450
          %v1461 = vunpack.c.h.b16 %v1449
          %v1462 = vunpack.c.h.b16 %v1450
          %v1463 = vpack.c.b16 %v1456, %v1455
          %v1464 = vpack.c.b16 %v1458, %v1457
          %v1465 = vpack.c.b16 %v1460, %v1459
          %v1466 = vpack.c.b16 %v1462, %v1461
          %1471 = vst [vmem:[%s374] sm:$0xff] %v1463
          %1472 = vst [vmem:[%s374 + $0x8] sm:$0xff] %v1464
          %1473 = vst [vmem:[%s374 + $0x10] sm:$0xff] %v1465
          %1474 = vst [vmem:[%s374 + $0x18] sm:$0xff] %v1466
        $region56: #{tpu_custom_call.1} parent=51 // pred_fallthru
          _
        %s1475 = sand.u32 %s235, 1
        %s1476 = scalar_lea.sflag [#allocation4], %s1475
        %s1477 = sand.u32 %s235, 1
        %s1478 = smul.addr %s1477, 32
        %s1479 = scalar_lea.vmem [#allocation3], %s1478
        // Predicated region
        $region57: #{tpu_custom_call.1} parent=51 // pred_check
          %p1480 = pneg %p245
        $region58: #{tpu_custom_call.1} parent=51 // pred_check_branch
          %1482 = sbr.rel (%p1480) target = $region60
        $region59: #{tpu_custom_call.1} parent=51 // pred_region
          %s1484 = ssub.s32 512, 512
          %1485 = vsyncadd %s1476, %s1484
          %s1486 = smul.addr %s26, 8
          %s1487 = smul.addr %s1486, 64
          %s1488 = scalar_lea.hbm %s8, %s1487
          %s1489 = sshll.u32 %s1479, 4
          %s1490 = int_to_ptr.vmem [resolvable:$true] %s1489
          %1495 = dma.vmem_to_hbm [thread:$0]  %s1490, 512, %s1488, %s1476, 128, 128, 8
        $region60: #{tpu_custom_call.1} parent=51 // pred_fallthru
          _
      $region52: #{tpu_custom_call.1} parent=5 // pred_fallthru
        _
      %p1496 = scmp.le.s32.totalorder 2, %s17
      // Predicated region
      $region61: #{tpu_custom_call.1} parent=5 // pred_check
        %p1497 = pneg %p1496
      $region62: #{tpu_custom_call.1} parent=5 // pred_check_branch
        %1499 = sbr.rel (%p1497) target = $region64
      $region63: #{tpu_custom_call.1} parent=5 // pred_region
        %s1500 = ssub.s32 %s17, 2
        // Predicated region
        $region65: #{tpu_custom_call.1} parent=63 // pred_check
          %p1501 = pneg %p251
        $region66: #{tpu_custom_call.1} parent=63 // pred_check_branch
          %1503 = sbr.rel (%p1501) target = $region68
        $region67: #{tpu_custom_call.1} parent=63 // pred_region
          %s1504 = sand.u32 %s236, 1
          %s1505 = scalar_lea.sflag [#allocation4], %s1504
          %s1506 = sand.u32 %s236, 1
          %s1507 = smul.addr %s1506, 32
          %s1508 = scalar_lea.vmem [#allocation3], %s1507
          %1509 = dma.done %s1505, 512
        $region68: #{tpu_custom_call.1} parent=63 // pred_fallthru
          _
      $region64: #{tpu_custom_call.1} parent=5 // pred_fallthru
        _
    $region6: #{tpu_custom_call.1} parent=1 // loop_footer
      %s21 = sadd.s32 1, %s17
    $region7: #{tpu_custom_call.1} parent=1 // loop_footer_branch
      %16 = sbr.rel target = $region3
    $region8: #{tpu_custom_call.1} parent=1 // loop_exit
      _
    %1510 = vsyncpa [#allocation4], 1
    %s1511 = scalar_lea.sflag [#allocation4], 1
    %1512 = vsyncpa %s1511, 1

</llo_original>
